<compile_context>
chip_gen: v7x
topology: tpu7x:2x2x1
jax: 0.10.0
libtpu: 0.0.40
codegen_flags: <defaults>
</compile_context>

<pallas_src>
import functools

import jax
import jax.numpy as jnp
from jax.experimental import pallas as pl
from jax.experimental.pallas import tpu as pltpu


def _round_up(x, m):
    return (x + m - 1) // m * m


def bilstm_chunk_kernel(x_ref, lo_ref, hi_ref, wih_ref, whh_ref, b_ref,
                        h0_ref, c0_ref, out_ref, h_sc, c_sc):
    """One time-chunk of the fused bidirectional LSTM recurrence.

    Grid: 1-D over time chunks ("arbitrary"); (h, c) carried in VMEM scratch.

    x_ref  : (TC*BP, 2E) bf16  merged time-major embeddings [x_t ; x_{Tp-1-t}]
    lo_ref : (BP, 2HP) int32   keep iff lo <= t < hi (fwd cols: [0,len); bwd: [Tp-len,Tp))
    hi_ref : (BP, 2HP) int32
    wih_ref: (2E, 8HP) bf16    block-diagonal per direction, gate-grouped columns
    whh_ref: (2HP, 8HP) bf16   block-diagonal per direction, gate-grouped columns
    b_ref  : (1, 8HP)  f32     fused bias (b_ih + b_hh)
    h0_ref, c0_ref: (BP, 2HP) f32 initial state [fwd | bwd]
    out_ref: (TC, BP, 2HP) f32 combined step s stores [h_fwd(t) | h_bwd(time Tp-1-t)],
                               t = chunk*TC + s
    h_sc, c_sc: (BP, 2HP) f32 VMEM scratch carrying state across chunks
    """
    TC, BP, H2P = out_ref.shape
    G = 4 * H2P

    chunk = pl.program_id(0)

    @pl.when(chunk == 0)
    def _():
        h_sc[...] = h0_ref[...]
        c_sc[...] = c0_ref[...]

    # Hoisted input projection for the whole chunk and BOTH directions at once: the
    # block-diagonal wih drives fwd columns from x_t and bwd columns from x_{Tp-1-t}
    # with no per-step select.  bf16 MXU inputs, f32 accumulation.
    proj = (jnp.dot(x_ref[...], wih_ref[...], preferred_element_type=jnp.float32)
            + b_ref[...])                       # (TC*BP, G) f32
    proj = proj.reshape(TC, BP, G)              # leading-axis per-step indexing (free)

    lo = lo_ref[...]                            # (BP, 2HP) int32, hoisted
    hi = hi_ref[...]
    whh = whh_ref[...]                          # (2HP, G) bf16, loop-invariant
    h = h_sc[...]                               # (BP, 2HP) f32 = [h_fwd | h_bwd]
    c = c_sc[...]

    base_t = chunk * TC
    # Bounded unroll (chunk-sized); every slice / store index is static.
    # TODO(synk): keep whh staged in the MXU across steps (pltpu.matmul_push_rhs /
    # matmul_acc_lhs / matmul_pop) once 2H/8H reach 128/256-class sizes and T is long.
    for s in range(TC):
        t = base_t + s
        gates = proj[s] + jnp.dot(h.astype(whh.dtype), whh,
                                  preferred_element_type=jnp.float32)   # (BP, G) f32

        # PyTorch gate order i, f, g, o; each 128-lane-aligned block is (BP,2HP)=[fwd|bwd].
        i_g = jax.nn.sigmoid(gates[:, 0 * H2P:1 * H2P])
        f_g = jax.nn.sigmoid(gates[:, 1 * H2P:2 * H2P])
        g_g = jnp.tanh(gates[:, 2 * H2P:3 * H2P])
        o_g = jax.nn.sigmoid(gates[:, 3 * H2P:4 * H2P])
        c_new = f_g * c + i_g * g_g
        h_new = o_g * jnp.tanh(c_new)

        keep = jnp.logical_and(t >= lo, t < hi)   # (BP, 2HP) bool, no mask DMA
        h = jnp.where(keep, h_new, h)             # packed-seq: freeze state on padding
        c = jnp.where(keep, c_new, c)
        out_ref[s] = jnp.where(keep, h_new, 0.0)  # full unmasked (BP, 2HP) tile store

    h_sc[...] = h
    c_sc[...] = c


def fuse_lstm_params(params):
    """One-time fusing of per-direction LSTM weights into the padded kernel layout.

    Column layout (width 8*HP; HP = H rounded up to 64 so 2*HP is a multiple of 128):
      [ i_fwd | i_bwd | f_fwd | f_bwd | g_fwd | g_bwd | o_fwd | o_bwd ], each block HP.
    wih is block-diagonal over the merged input [x_t ; x_rev_t]; whh is block-diagonal
    over the merged state [h_fwd | h_bwd].  Padded rows/cols are zero, so padded lanes
    never contaminate real lanes.
    """
    E = params["w_ih_f"].shape[0]
    H = params["w_hh_f"].shape[0]
    HP = _round_up(max(H, 64), 64)
    H2P = 2 * HP
    G = 4 * H2P

    wih = jnp.zeros((2 * E, G), jnp.float32)
    whh = jnp.zeros((H2P, G), jnp.float32)
    bias = jnp.zeros((1, G), jnp.float32)
    for k in range(4):                            # gate order i, f, g, o
        src = slice(k * H, (k + 1) * H)
        cf = k * H2P                              # fwd sub-block start (128-aligned)
        cb = k * H2P + HP                         # bwd sub-block start
        wih = wih.at[0:E, cf:cf + H].set(params["w_ih_f"][:, src])
        wih = wih.at[E:2 * E, cb:cb + H].set(params["w_ih_b"][:, src])
        whh = whh.at[0:H, cf:cf + H].set(params["w_hh_f"][:, src])
        whh = whh.at[HP:HP + H, cb:cb + H].set(params["w_hh_b"][:, src])
        bias = bias.at[0, cf:cf + H].set(params["b_f"][0, src])
        bias = bias.at[0, cb:cb + H].set(params["b_b"][0, src])

    return dict(
        emb=params["emb"],
        wih=wih.astype(jnp.bfloat16),             # bf16 MXU operands (f32 accumulation)
        whh=whh.astype(jnp.bfloat16),
        bias=bias,                                # bias stays f32 (post-accumulation add)
    )


@functools.partial(jax.jit,
                   static_argnames=("lengths", "hidden_size", "time_chunk"))
def delex_bilstm_forward(sents, h0, c0, fused, *, lengths, hidden_size,
                         time_chunk=4):
    """sents: (B, T) int32 ids; lengths: static tuple sorted descending (pack_padded).

    Returns (B, max(lengths), 2H) float32, matching
    pad_packed_sequence(lstm(pack_padded_sequence(...)), batch_first=True).
    """
    B, T = sents.shape
    H = hidden_size
    H2P, G = fused["whh"].shape
    HP = H2P // 2
    E = fused["wih"].shape[0] // 2
    assert HP >= H and H2P % 128 == 0 and G == 4 * H2P

    BP = _round_up(B, 8)                          # sublane-aligned batch padding
    TC = time_chunk
    Tp = _round_up(T, TC)                         # whole time chunks
    assert (TC * BP) % 16 == 0, "bf16 x-chunk needs sublane count % 16 == 0"
    num_chunks = Tp // TC

    # Embedding lookup, gathered directly in time-major order (kills the (B,T,E) -> (T,B,E)
    # XLA transpose); padding row 0 is zero.  Dropout is inference-mode identity.
    # TODO(synk): for production vocab/seq sizes fuse the gather into the kernel via a
    # scalar-prefetched pl.Element row-gather index_map instead of materializing emb[...].
    x_tm = fused["emb"][sents.T]                                    # (T, B, E) f32
    x_tm = jnp.pad(x_tm, ((0, Tp - T), (0, BP - B), (0, 0)))        # (Tp, BP, E)
    # Pre-merged [x_t ; x_{Tp-1-t}]: with the block-diagonal wih the per-step fwd/bwd
    # select disappears from the recurrence critical path.
    x_merged = jnp.concatenate([x_tm, x_tm[::-1]], axis=-1)         # (Tp, BP, 2E)
    x2d = x_merged.reshape(Tp * BP, 2 * E).astype(jnp.bfloat16)

    # Validity windows (keep iff lo <= t < hi): fwd cols use [0, len[b]), bwd cols use
    # [Tp - len[b], Tp).  Replaces the old full-size float mask DMA with 2x(BP, 2HP) int32.
    lens = jnp.zeros((BP,), jnp.int32).at[:B].set(jnp.asarray(lengths, jnp.int32))
    lo = jnp.concatenate(
        [jnp.zeros((BP, HP), jnp.int32),
         jnp.broadcast_to((Tp - lens)[:, None], (BP, HP))], axis=1)
    hi = jnp.concatenate(
        [jnp.broadcast_to(lens[:, None], (BP, HP)),
         jnp.full((BP, HP), Tp, jnp.int32)], axis=1)

    # Initial state, zero-padded into the aligned [fwd | bwd] layout.
    h0c = jnp.zeros((BP, H2P), jnp.float32)
    h0c = h0c.at[:B, 0:H].set(h0[0]).at[:B, HP:HP + H].set(h0[1])
    c0c = jnp.zeros((BP, H2P), jnp.float32)
    c0c = c0c.at[:B, 0:H].set(c0[0]).at[:B, HP:HP + H].set(c0[1])

    # 1-D "arbitrary" grid over time chunks; (h, c) carried in VMEM scratch, x / out
    # chunks pipelined by BlockSpec, weights / windows resident (constant index maps).
    # TODO(synk): for v7x production shapes add a "parallel" batch-split grid axis
    # (megacore) and size TC against the 64 MiB VMEM budget (set vmem_limit_bytes).
    out_raw = pl.pallas_call(
        bilstm_chunk_kernel,
        out_shape=jax.ShapeDtypeStruct((Tp, BP, H2P), jnp.float32),
        grid_spec=pltpu.PrefetchScalarGridSpec(
            num_scalar_prefetch=0,
            grid=(num_chunks,),
            in_specs=[
                pl.BlockSpec((TC * BP, 2 * E), lambda i: (i, 0)),   # x chunk
                pl.BlockSpec((BP, H2P), lambda i: (0, 0)),          # lo
                pl.BlockSpec((BP, H2P), lambda i: (0, 0)),          # hi
                pl.BlockSpec((2 * E, G), lambda i: (0, 0)),         # wih
                pl.BlockSpec((H2P, G), lambda i: (0, 0)),           # whh
                pl.BlockSpec((1, G), lambda i: (0, 0)),             # bias
                pl.BlockSpec((BP, H2P), lambda i: (0, 0)),          # h0
                pl.BlockSpec((BP, H2P), lambda i: (0, 0)),          # c0
            ],
            out_specs=pl.BlockSpec((TC, BP, H2P), lambda i: (i, 0, 0)),
            scratch_shapes=[pltpu.VMEM((BP, H2P), jnp.float32),     # carried h
                            pltpu.VMEM((BP, H2P), jnp.float32)],    # carried c
        ),
        compiler_params=pltpu.CompilerParams(
            dimension_semantics=("arbitrary",)),
    )(x2d, lo, hi, fused["wih"], fused["whh"], fused["bias"], h0c, c0c)

    # Un-pad and time-align: the fwd half is already at original time t; the bwd half at
    # combined step t belongs to original time Tp-1-t, so flip it along time.  Kept
    # outside the kernel so every in-kernel store stays a full unmasked 128-lane tile.
    out_fwd = out_raw[:T, :B, 0:H]                       # (T, B, H)
    out_bwd = out_raw[::-1, :B, HP:HP + H][:T]           # (T, B, H), time-aligned
    out = jnp.concatenate([out_fwd, out_bwd], axis=-1)   # (T, B, 2H)
    out = jnp.transpose(out, (1, 0, 2))                  # batch_first
    return out[:, :max(lengths), :]


def make_params(key, vocab_size, emb_size, hidden_size):
    """Deterministic synthetic parameters matching nn.Embedding + bidirectional nn.LSTM."""
    ks = jax.random.split(key, 9)
    H, E = hidden_size, emb_size
    scale = 1.0 / jnp.sqrt(jnp.float32(H))

    emb = jax.random.normal(ks[0], (vocab_size, E), jnp.float32) * 0.1
    emb = emb.at[0].set(0.0)                              # padding_idx=0

    def u(k, shape):
        return jax.random.uniform(k, shape, jnp.float32, -scale, scale)

    # PyTorch stores weight_ih_l0 as (4H, E); we keep the transpose for x @ W^T.
    return dict(
        emb=emb,
        w_ih_f=u(ks[1], (E, 4 * H)),
        w_hh_f=u(ks[2], (H, 4 * H)),
        b_f=u(ks[3], (1, 4 * H)) + u(ks[4], (1, 4 * H)),  # b_ih + b_hh
        w_ih_b=u(ks[5], (E, 4 * H)),
        w_hh_b=u(ks[6], (H, 4 * H)),
        b_b=u(ks[7], (1, 4 * H)) + u(ks[8], (1, 4 * H)),
    )


if __name__ == "__main__":
    vocab_size, emb_size, hidden_size = 50, 32, 32
    B, T = 2, 8
    lengths = (8, 6)                      # sorted descending (pack_padded requirement)

    key = jax.random.PRNGKey(0)
    k_par, k_tok, k_h, k_c = jax.random.split(key, 4)
    params = make_params(k_par, vocab_size, emb_size, hidden_size)
    fused = fuse_lstm_params(params)      # one-time prep, outside the jitted forward

    # init_hidden: torch.randn(2, B, H) for each of (h0, c0); deterministic here.
    h0 = jax.random.normal(k_h, (2, B, hidden_size), jnp.float32)
    c0 = jax.random.normal(k_c, (2, B, hidden_size), jnp.float32)

    sents = jax.random.randint(k_tok, (B, T), 1, vocab_size, dtype=jnp.int32)
    pad_mask = jnp.arange(T)[None, :] < jnp.asarray(lengths)[:, None]
    sents = jnp.where(pad_mask, sents, 0)  # id 0 == padding_idx

    out = delex_bilstm_forward(sents, h0, c0, fused, lengths=lengths,
                               hidden_size=hidden_size, time_chunk=4)
    out = jax.block_until_ready(out)
    assert out.shape == (B, max(lengths), 2 * hidden_size), out.shape
    assert bool(jnp.isfinite(out).all())
    print("KERNEL_OK")
</pallas_src>

<mosaic_0001>
module attributes {stable_mosaic.version = 11 : i64} {
  func.func @bilstm_chunk_kernel(%arg0: i32, %arg1: memref<32x64xbf16, #tpu.memory_space<vmem>>, %arg2: memref<8x128xi32, #tpu.memory_space<vmem>>, %arg3: memref<8x128xi32, #tpu.memory_space<vmem>>, %arg4: memref<64x512xbf16, #tpu.memory_space<vmem>>, %arg5: memref<128x512xbf16, #tpu.memory_space<vmem>>, %arg6: memref<1x512xf32, #tpu.memory_space<vmem>>, %arg7: memref<8x128xf32, #tpu.memory_space<vmem>>, %arg8: memref<8x128xf32, #tpu.memory_space<vmem>>, %arg9: memref<4x8x128xf32, #tpu.memory_space<vmem>>, %arg10: memref<8x128xf32, #tpu.memory_space<vmem>>, %arg11: memref<8x128xf32, #tpu.memory_space<vmem>>) attributes {dimension_semantics = [#tpu.dimension_semantics<arbitrary>], iteration_bounds = array<i64: 2>, scalar_prefetch = 0 : i64, scratch_operands = 2 : i64, tpu.core_type = #tpu.core_type<tc>, window_params = [{transform_indices = @transform_0, window_bounds = array<i64: 32, 64>}, {pipeline_mode = #tpu.pipeline_mode<synchronous>, transform_indices = @transform_1, window_bounds = array<i64: 8, 128>}, {pipeline_mode = #tpu.pipeline_mode<synchronous>, transform_indices = @transform_2, window_bounds = array<i64: 8, 128>}, {pipeline_mode = #tpu.pipeline_mode<synchronous>, transform_indices = @transform_3, window_bounds = array<i64: 64, 512>}, {pipeline_mode = #tpu.pipeline_mode<synchronous>, transform_indices = @transform_4, window_bounds = array<i64: 128, 512>}, {pipeline_mode = #tpu.pipeline_mode<synchronous>, transform_indices = @transform_5, window_bounds = array<i64: 1, 512>}, {pipeline_mode = #tpu.pipeline_mode<synchronous>, transform_indices = @transform_6, window_bounds = array<i64: 8, 128>}, {pipeline_mode = #tpu.pipeline_mode<synchronous>, transform_indices = @transform_7, window_bounds = array<i64: 8, 128>}, {transform_indices = @transform_8, window_bounds = array<i64: 4, 8, 128>}]} {
    %c0_i32 = arith.constant 0 : i32
    %0 = arith.cmpi eq, %arg0, %c0_i32 : i32
    %1 = arith.extui %0 : i1 to i32
    %c0_i32_0 = arith.constant 0 : i32
    %2 = arith.cmpi ne, %1, %c0_i32_0 : i32
    scf.if %2 {
      %c0_50 = arith.constant 0 : index
      %c0_51 = arith.constant 0 : index
      %190 = vector.load %arg7[%c0_50, %c0_51] : memref<8x128xf32, #tpu.memory_space<vmem>>, vector<8x128xf32>
      %c0_52 = arith.constant 0 : index
      %c0_53 = arith.constant 0 : index
      %191 = vector.load %arg10[%c0_52, %c0_53] : memref<8x128xf32, #tpu.memory_space<vmem>>, vector<8x128xf32>
      tpu.vector_store %arg10[%c0_52, %c0_53], %190 {strides = array<i32>} : memref<8x128xf32, #tpu.memory_space<vmem>>, vector<8x128xf32>,
      %c0_54 = arith.constant 0 : index
      %c0_55 = arith.constant 0 : index
      %192 = vector.load %arg8[%c0_54, %c0_55] : memref<8x128xf32, #tpu.memory_space<vmem>>, vector<8x128xf32>
      %c0_56 = arith.constant 0 : index
      %c0_57 = arith.constant 0 : index
      %193 = vector.load %arg11[%c0_56, %c0_57] : memref<8x128xf32, #tpu.memory_space<vmem>>, vector<8x128xf32>
      tpu.vector_store %arg11[%c0_56, %c0_57], %192 {strides = array<i32>} : memref<8x128xf32, #tpu.memory_space<vmem>>, vector<8x128xf32>,
    } else {
    }
    %c0 = arith.constant 0 : index
    %c0_1 = arith.constant 0 : index
    %3 = vector.load %arg1[%c0, %c0_1] : memref<32x64xbf16, #tpu.memory_space<vmem>>, vector<32x64xbf16>
    %c0_2 = arith.constant 0 : index
    %c0_3 = arith.constant 0 : index
    %4 = vector.load %arg4[%c0_2, %c0_3] : memref<64x512xbf16, #tpu.memory_space<vmem>>, vector<64x512xbf16>
    %cst = arith.constant dense<0.000000e+00> : vector<32x512xf32>
    %5 = tpu.matmul %3, %4, %cst {dimension_numbers = #tpu.dot_dimension_numbers<[1], [0], [0], [1], [0, 0, 1, 1], [], []>} : vector<32x64xbf16>, vector<64x512xbf16>, vector<32x512xf32> -> vector<32x512xf32>
    %c0_4 = arith.constant 0 : index
    %c0_5 = arith.constant 0 : index
    %6 = vector.load %arg6[%c0_4, %c0_5] : memref<1x512xf32, #tpu.memory_space<vmem>>, vector<1x512xf32>
    %7 = vector.broadcast %6 : vector<1x512xf32> to vector<32x512xf32>
    %8 = arith.addf %5, %7 : vector<32x512xf32>
    %9 = vector.shape_cast %8 : vector<32x512xf32> to vector<4x8x512xf32>
    %c0_6 = arith.constant 0 : index
    %c0_7 = arith.constant 0 : index
    %10 = vector.load %arg2[%c0_6, %c0_7] : memref<8x128xi32, #tpu.memory_space<vmem>>, vector<8x128xi32>
    %c0_8 = arith.constant 0 : index
    %c0_9 = arith.constant 0 : index
    %11 = vector.load %arg3[%c0_8, %c0_9] : memref<8x128xi32, #tpu.memory_space<vmem>>, vector<8x128xi32>
    %c0_10 = arith.constant 0 : index
    %c0_11 = arith.constant 0 : index
    %12 = vector.load %arg5[%c0_10, %c0_11] : memref<128x512xbf16, #tpu.memory_space<vmem>>, vector<128x512xbf16>
    %c0_12 = arith.constant 0 : index
    %c0_13 = arith.constant 0 : index
    %13 = vector.load %arg10[%c0_12, %c0_13] : memref<8x128xf32, #tpu.memory_space<vmem>>, vector<8x128xf32>
    %c0_14 = arith.constant 0 : index
    %c0_15 = arith.constant 0 : index
    %14 = vector.load %arg11[%c0_14, %c0_15] : memref<8x128xf32, #tpu.memory_space<vmem>>, vector<8x128xf32>
    %c4_i32 = arith.constant 4 : i32
    %15 = arith.muli %arg0, %c4_i32 : i32
    %c0_i32_16 = arith.constant 0 : i32
    %16 = arith.addi %15, %c0_i32_16 : i32
    %17 = vector.extract_strided_slice %9 {offsets = [0, 0, 0], sizes = [1, 8, 512], strides = [1, 1, 1]} : vector<4x8x512xf32> to vector<1x8x512xf32>
    %18 = vector.shape_cast %17 : vector<1x8x512xf32> to vector<8x512xf32>
    %19 = arith.truncf %13 : vector<8x128xf32> to vector<8x128xbf16>
    %cst_17 = arith.constant dense<0.000000e+00> : vector<8x512xf32>
    %20 = tpu.matmul %19, %12, %cst_17 {dimension_numbers = #tpu.dot_dimension_numbers<[1], [0], [0], [1], [0, 0, 1, 1], [], []>} : vector<8x128xbf16>, vector<128x512xbf16>, vector<8x512xf32> -> vector<8x512xf32>
    %21 = arith.addf %18, %20 : vector<8x512xf32>
    %22 = vector.extract_strided_slice %21 {offsets = [0, 0], sizes = [8, 128], strides = [1, 1]} : vector<8x512xf32> to vector<8x128xf32>
    %23 = arith.negf %22 : vector<8x128xf32>
    %24 = math.exp %23 : vector<8x128xf32>
    %cst_18 = arith.constant 1.000000e+00 : f32
    %25 = vector.broadcast %cst_18 : f32 to vector<8x128xf32>
    %26 = arith.addf %25, %24 : vector<8x128xf32>
    %27 = arith.divf %25, %26 : vector<8x128xf32>
    %28 = vector.extract_strided_slice %21 {offsets = [0, 128], sizes = [8, 128], strides = [1, 1]} : vector<8x512xf32> to vector<8x128xf32>
    %29 = arith.negf %28 : vector<8x128xf32>
    %30 = math.exp %29 : vector<8x128xf32>
    %cst_19 = arith.constant 1.000000e+00 : f32
    %31 = vector.broadcast %cst_19 : f32 to vector<8x128xf32>
    %32 = arith.addf %31, %30 : vector<8x128xf32>
    %33 = arith.divf %31, %32 : vector<8x128xf32>
    %34 = vector.extract_strided_slice %21 {offsets = [0, 256], sizes = [8, 128], strides = [1, 1]} : vector<8x512xf32> to vector<8x128xf32>
    %35 = math.tanh %34 : vector<8x128xf32>
    %36 = vector.extract_strided_slice %21 {offsets = [0, 384], sizes = [8, 128], strides = [1, 1]} : vector<8x512xf32> to vector<8x128xf32>
    %37 = arith.negf %36 : vector<8x128xf32>
    %38 = math.exp %37 : vector<8x128xf32>
    %cst_20 = arith.constant 1.000000e+00 : f32
    %39 = vector.broadcast %cst_20 : f32 to vector<8x128xf32>
    %40 = arith.addf %39, %38 : vector<8x128xf32>
    %41 = arith.divf %39, %40 : vector<8x128xf32>
    %42 = arith.mulf %33, %14 : vector<8x128xf32>
    %43 = arith.mulf %27, %35 : vector<8x128xf32>
    %44 = arith.addf %42, %43 : vector<8x128xf32>
    %45 = math.tanh %44 : vector<8x128xf32>
    %46 = arith.mulf %41, %45 : vector<8x128xf32>
    %47 = vector.broadcast %16 : i32 to vector<8x128xi32>
    %48 = arith.cmpi sge, %47, %10 : vector<8x128xi32>
    %49 = vector.broadcast %16 : i32 to vector<8x128xi32>
    %50 = arith.cmpi slt, %49, %11 : vector<8x128xi32>
    %51 = arith.andi %48, %50 : vector<8x128xi1>
    %52 = arith.select %51, %46, %13 : vector<8x128xi1>, vector<8x128xf32>
    %53 = arith.select %51, %44, %14 : vector<8x128xi1>, vector<8x128xf32>
    %cst_21 = arith.constant 0.000000e+00 : f32
    %54 = vector.broadcast %cst_21 : f32 to vector<8x128xf32>
    %55 = arith.select %51, %46, %54 : vector<8x128xi1>, vector<8x128xf32>
    %c0_22 = arith.constant 0 : index
    %c0_23 = arith.constant 0 : index
    %c0_24 = arith.constant 0 : index
    %56 = vector.load %arg9[%c0_22, %c0_23, %c0_24] : memref<4x8x128xf32, #tpu.memory_space<vmem>>, vector<1x8x128xf32>
    %57 = vector.shape_cast %56 : vector<1x8x128xf32> to vector<8x128xf32>
    %58 = vector.shape_cast %55 : vector<8x128xf32> to vector<1x8x128xf32>
    tpu.vector_store %arg9[%c0_22, %c0_23, %c0_24], %58 {strides = array<i32>} : memref<4x8x128xf32, #tpu.memory_space<vmem>>, vector<1x8x128xf32>,
    %c1_i32 = arith.constant 1 : i32
    %59 = arith.addi %15, %c1_i32 : i32
    %60 = vector.extract_strided_slice %9 {offsets = [1, 0, 0], sizes = [1, 8, 512], strides = [1, 1, 1]} : vector<4x8x512xf32> to vector<1x8x512xf32>
    %61 = vector.shape_cast %60 : vector<1x8x512xf32> to vector<8x512xf32>
    %62 = arith.truncf %52 : vector<8x128xf32> to vector<8x128xbf16>
    %cst_25 = arith.constant dense<0.000000e+00> : vector<8x512xf32>
    %63 = tpu.matmul %62, %12, %cst_25 {dimension_numbers = #tpu.dot_dimension_numbers<[1], [0], [0], [1], [0, 0, 1, 1], [], []>} : vector<8x128xbf16>, vector<128x512xbf16>, vector<8x512xf32> -> vector<8x512xf32>
    %64 = arith.addf %61, %63 : vector<8x512xf32>
    %65 = vector.extract_strided_slice %64 {offsets = [0, 0], sizes = [8, 128], strides = [1, 1]} : vector<8x512xf32> to vector<8x128xf32>
    %66 = arith.negf %65 : vector<8x128xf32>
    %67 = math.exp %66 : vector<8x128xf32>
    %cst_26 = arith.constant 1.000000e+00 : f32
    %68 = vector.broadcast %cst_26 : f32 to vector<8x128xf32>
    %69 = arith.addf %68, %67 : vector<8x128xf32>
    %70 = arith.divf %68, %69 : vector<8x128xf32>
    %71 = vector.extract_strided_slice %64 {offsets = [0, 128], sizes = [8, 128], strides = [1, 1]} : vector<8x512xf32> to vector<8x128xf32>
    %72 = arith.negf %71 : vector<8x128xf32>
    %73 = math.exp %72 : vector<8x128xf32>
    %cst_27 = arith.constant 1.000000e+00 : f32
    %74 = vector.broadcast %cst_27 : f32 to vector<8x128xf32>
    %75 = arith.addf %74, %73 : vector<8x128xf32>
    %76 = arith.divf %74, %75 : vector<8x128xf32>
    %77 = vector.extract_strided_slice %64 {offsets = [0, 256], sizes = [8, 128], strides = [1, 1]} : vector<8x512xf32> to vector<8x128xf32>
    %78 = math.tanh %77 : vector<8x128xf32>
    %79 = vector.extract_strided_slice %64 {offsets = [0, 384], sizes = [8, 128], strides = [1, 1]} : vector<8x512xf32> to vector<8x128xf32>
    %80 = arith.negf %79 : vector<8x128xf32>
    %81 = math.exp %80 : vector<8x128xf32>
    %cst_28 = arith.constant 1.000000e+00 : f32
    %82 = vector.broadcast %cst_28 : f32 to vector<8x128xf32>
    %83 = arith.addf %82, %81 : vector<8x128xf32>
    %84 = arith.divf %82, %83 : vector<8x128xf32>
    %85 = arith.mulf %76, %53 : vector<8x128xf32>
    %86 = arith.mulf %70, %78 : vector<8x128xf32>
    %87 = arith.addf %85, %86 : vector<8x128xf32>
    %88 = math.tanh %87 : vector<8x128xf32>
    %89 = arith.mulf %84, %88 : vector<8x128xf32>
    %90 = vector.broadcast %59 : i32 to vector<8x128xi32>
    %91 = arith.cmpi sge, %90, %10 : vector<8x128xi32>
    %92 = vector.broadcast %59 : i32 to vector<8x128xi32>
    %93 = arith.cmpi slt, %92, %11 : vector<8x128xi32>
    %94 = arith.andi %91, %93 : vector<8x128xi1>
    %95 = arith.select %94, %89, %52 : vector<8x128xi1>, vector<8x128xf32>
    %96 = arith.select %94, %87, %53 : vector<8x128xi1>, vector<8x128xf32>
    %cst_29 = arith.constant 0.000000e+00 : f32
    %97 = vector.broadcast %cst_29 : f32 to vector<8x128xf32>
    %98 = arith.select %94, %89, %97 : vector<8x128xi1>, vector<8x128xf32>
    %c1 = arith.constant 1 : index
    %c0_30 = arith.constant 0 : index
    %c0_31 = arith.constant 0 : index
    %99 = vector.load %arg9[%c1, %c0_30, %c0_31] : memref<4x8x128xf32, #tpu.memory_space<vmem>>, vector<1x8x128xf32>
    %100 = vector.shape_cast %99 : vector<1x8x128xf32> to vector<8x128xf32>
    %101 = vector.shape_cast %98 : vector<8x128xf32> to vector<1x8x128xf32>
    tpu.vector_store %arg9[%c1, %c0_30, %c0_31], %101 {strides = array<i32>} : memref<4x8x128xf32, #tpu.memory_space<vmem>>, vector<1x8x128xf32>,
    %c2_i32 = arith.constant 2 : i32
    %102 = arith.addi %15, %c2_i32 : i32
    %103 = vector.extract_strided_slice %9 {offsets = [2, 0, 0], sizes = [1, 8, 512], strides = [1, 1, 1]} : vector<4x8x512xf32> to vector<1x8x512xf32>
    %104 = vector.shape_cast %103 : vector<1x8x512xf32> to vector<8x512xf32>
    %105 = arith.truncf %95 : vector<8x128xf32> to vector<8x128xbf16>
    %cst_32 = arith.constant dense<0.000000e+00> : vector<8x512xf32>
    %106 = tpu.matmul %105, %12, %cst_32 {dimension_numbers = #tpu.dot_dimension_numbers<[1], [0], [0], [1], [0, 0, 1, 1], [], []>} : vector<8x128xbf16>, vector<128x512xbf16>, vector<8x512xf32> -> vector<8x512xf32>
    %107 = arith.addf %104, %106 : vector<8x512xf32>
    %108 = vector.extract_strided_slice %107 {offsets = [0, 0], sizes = [8, 128], strides = [1, 1]} : vector<8x512xf32> to vector<8x128xf32>
    %109 = arith.negf %108 : vector<8x128xf32>
    %110 = math.exp %109 : vector<8x128xf32>
    %cst_33 = arith.constant 1.000000e+00 : f32
    %111 = vector.broadcast %cst_33 : f32 to vector<8x128xf32>
    %112 = arith.addf %111, %110 : vector<8x128xf32>
    %113 = arith.divf %111, %112 : vector<8x128xf32>
    %114 = vector.extract_strided_slice %107 {offsets = [0, 128], sizes = [8, 128], strides = [1, 1]} : vector<8x512xf32> to vector<8x128xf32>
    %115 = arith.negf %114 : vector<8x128xf32>
    %116 = math.exp %115 : vector<8x128xf32>
    %cst_34 = arith.constant 1.000000e+00 : f32
    %117 = vector.broadcast %cst_34 : f32 to vector<8x128xf32>
    %118 = arith.addf %117, %116 : vector<8x128xf32>
    %119 = arith.divf %117, %118 : vector<8x128xf32>
    %120 = vector.extract_strided_slice %107 {offsets = [0, 256], sizes = [8, 128], strides = [1, 1]} : vector<8x512xf32> to vector<8x128xf32>
    %121 = math.tanh %120 : vector<8x128xf32>
    %122 = vector.extract_strided_slice %107 {offsets = [0, 384], sizes = [8, 128], strides = [1, 1]} : vector<8x512xf32> to vector<8x128xf32>
    %123 = arith.negf %122 : vector<8x128xf32>
    %124 = math.exp %123 : vector<8x128xf32>
    %cst_35 = arith.constant 1.000000e+00 : f32
    %125 = vector.broadcast %cst_35 : f32 to vector<8x128xf32>
    %126 = arith.addf %125, %124 : vector<8x128xf32>
    %127 = arith.divf %125, %126 : vector<8x128xf32>
    %128 = arith.mulf %119, %96 : vector<8x128xf32>
    %129 = arith.mulf %113, %121 : vector<8x128xf32>
    %130 = arith.addf %128, %129 : vector<8x128xf32>
    %131 = math.tanh %130 : vector<8x128xf32>
    %132 = arith.mulf %127, %131 : vector<8x128xf32>
    %133 = vector.broadcast %102 : i32 to vector<8x128xi32>
    %134 = arith.cmpi sge, %133, %10 : vector<8x128xi32>
    %135 = vector.broadcast %102 : i32 to vector<8x128xi32>
    %136 = arith.cmpi slt, %135, %11 : vector<8x128xi32>
    %137 = arith.andi %134, %136 : vector<8x128xi1>
    %138 = arith.select %137, %132, %95 : vector<8x128xi1>, vector<8x128xf32>
    %139 = arith.select %137, %130, %96 : vector<8x128xi1>, vector<8x128xf32>
    %cst_36 = arith.constant 0.000000e+00 : f32
    %140 = vector.broadcast %cst_36 : f32 to vector<8x128xf32>
    %141 = arith.select %137, %132, %140 : vector<8x128xi1>, vector<8x128xf32>
    %c2 = arith.constant 2 : index
    %c0_37 = arith.constant 0 : index
    %c0_38 = arith.constant 0 : index
    %142 = vector.load %arg9[%c2, %c0_37, %c0_38] : memref<4x8x128xf32, #tpu.memory_space<vmem>>, vector<1x8x128xf32>
    %143 = vector.shape_cast %142 : vector<1x8x128xf32> to vector<8x128xf32>
    %144 = vector.shape_cast %141 : vector<8x128xf32> to vector<1x8x128xf32>
    tpu.vector_store %arg9[%c2, %c0_37, %c0_38], %144 {strides = array<i32>} : memref<4x8x128xf32, #tpu.memory_space<vmem>>, vector<1x8x128xf32>,
    %c3_i32 = arith.constant 3 : i32
    %145 = arith.addi %15, %c3_i32 : i32
    %146 = vector.extract_strided_slice %9 {offsets = [3, 0, 0], sizes = [1, 8, 512], strides = [1, 1, 1]} : vector<4x8x512xf32> to vector<1x8x512xf32>
    %147 = vector.shape_cast %146 : vector<1x8x512xf32> to vector<8x512xf32>
    %148 = arith.truncf %138 : vector<8x128xf32> to vector<8x128xbf16>
    %cst_39 = arith.constant dense<0.000000e+00> : vector<8x512xf32>
    %149 = tpu.matmul %148, %12, %cst_39 {dimension_numbers = #tpu.dot_dimension_numbers<[1], [0], [0], [1], [0, 0, 1, 1], [], []>} : vector<8x128xbf16>, vector<128x512xbf16>, vector<8x512xf32> -> vector<8x512xf32>
    %150 = arith.addf %147, %149 : vector<8x512xf32>
    %151 = vector.extract_strided_slice %150 {offsets = [0, 0], sizes = [8, 128], strides = [1, 1]} : vector<8x512xf32> to vector<8x128xf32>
    %152 = arith.negf %151 : vector<8x128xf32>
    %153 = math.exp %152 : vector<8x128xf32>
    %cst_40 = arith.constant 1.000000e+00 : f32
    %154 = vector.broadcast %cst_40 : f32 to vector<8x128xf32>
    %155 = arith.addf %154, %153 : vector<8x128xf32>
    %156 = arith.divf %154, %155 : vector<8x128xf32>
    %157 = vector.extract_strided_slice %150 {offsets = [0, 128], sizes = [8, 128], strides = [1, 1]} : vector<8x512xf32> to vector<8x128xf32>
    %158 = arith.negf %157 : vector<8x128xf32>
    %159 = math.exp %158 : vector<8x128xf32>
    %cst_41 = arith.constant 1.000000e+00 : f32
    %160 = vector.broadcast %cst_41 : f32 to vector<8x128xf32>
    %161 = arith.addf %160, %159 : vector<8x128xf32>
    %162 = arith.divf %160, %161 : vector<8x128xf32>
    %163 = vector.extract_strided_slice %150 {offsets = [0, 256], sizes = [8, 128], strides = [1, 1]} : vector<8x512xf32> to vector<8x128xf32>
    %164 = math.tanh %163 : vector<8x128xf32>
    %165 = vector.extract_strided_slice %150 {offsets = [0, 384], sizes = [8, 128], strides = [1, 1]} : vector<8x512xf32> to vector<8x128xf32>
    %166 = arith.negf %165 : vector<8x128xf32>
    %167 = math.exp %166 : vector<8x128xf32>
    %cst_42 = arith.constant 1.000000e+00 : f32
    %168 = vector.broadcast %cst_42 : f32 to vector<8x128xf32>
    %169 = arith.addf %168, %167 : vector<8x128xf32>
    %170 = arith.divf %168, %169 : vector<8x128xf32>
    %171 = arith.mulf %162, %139 : vector<8x128xf32>
    %172 = arith.mulf %156, %164 : vector<8x128xf32>
    %173 = arith.addf %171, %172 : vector<8x128xf32>
    %174 = math.tanh %173 : vector<8x128xf32>
    %175 = arith.mulf %170, %174 : vector<8x128xf32>
    %176 = vector.broadcast %145 : i32 to vector<8x128xi32>
    %177 = arith.cmpi sge, %176, %10 : vector<8x128xi32>
    %178 = vector.broadcast %145 : i32 to vector<8x128xi32>
    %179 = arith.cmpi slt, %178, %11 : vector<8x128xi32>
    %180 = arith.andi %177, %179 : vector<8x128xi1>
    %181 = arith.select %180, %175, %138 : vector<8x128xi1>, vector<8x128xf32>
    %182 = arith.select %180, %173, %139 : vector<8x128xi1>, vector<8x128xf32>
    %cst_43 = arith.constant 0.000000e+00 : f32
    %183 = vector.broadcast %cst_43 : f32 to vector<8x128xf32>
    %184 = arith.select %180, %175, %183 : vector<8x128xi1>, vector<8x128xf32>
    %c3 = arith.constant 3 : index
    %c0_44 = arith.constant 0 : index
    %c0_45 = arith.constant 0 : index
    %185 = vector.load %arg9[%c3, %c0_44, %c0_45] : memref<4x8x128xf32, #tpu.memory_space<vmem>>, vector<1x8x128xf32>
    %186 = vector.shape_cast %185 : vector<1x8x128xf32> to vector<8x128xf32>
    %187 = vector.shape_cast %184 : vector<8x128xf32> to vector<1x8x128xf32>
    tpu.vector_store %arg9[%c3, %c0_44, %c0_45], %187 {strides = array<i32>} : memref<4x8x128xf32, #tpu.memory_space<vmem>>, vector<1x8x128xf32>,
    %c0_46 = arith.constant 0 : index
    %c0_47 = arith.constant 0 : index
    %188 = vector.load %arg10[%c0_46, %c0_47] : memref<8x128xf32, #tpu.memory_space<vmem>>, vector<8x128xf32>
    tpu.vector_store %arg10[%c0_46, %c0_47], %181 {strides = array<i32>} : memref<8x128xf32, #tpu.memory_space<vmem>>, vector<8x128xf32>,
    %c0_48 = arith.constant 0 : index
    %c0_49 = arith.constant 0 : index
    %189 = vector.load %arg11[%c0_48, %c0_49] : memref<8x128xf32, #tpu.memory_space<vmem>>, vector<8x128xf32>
    tpu.vector_store %arg11[%c0_48, %c0_49], %182 {strides = array<i32>} : memref<8x128xf32, #tpu.memory_space<vmem>>, vector<8x128xf32>,
    return
  }
  func.func @transform_0(%arg0: i32) -> (i32, i32) {
    %c0_i32 = arith.constant 0 : i32
    %c0_i32_0 = arith.constant 0 : i32
    return %arg0, %c0_i32 : i32, i32
  }
  func.func @transform_1(%arg0: i32) -> (i32, i32) {
    %c0_i32 = arith.constant 0 : i32
    %c0_i32_0 = arith.constant 0 : i32
    %c0_i32_1 = arith.constant 0 : i32
    return %c0_i32, %c0_i32_0 : i32, i32
  }
  func.func @transform_2(%arg0: i32) -> (i32, i32) {
    %c0_i32 = arith.constant 0 : i32
    %c0_i32_0 = arith.constant 0 : i32
    %c0_i32_1 = arith.constant 0 : i32
    return %c0_i32, %c0_i32_0 : i32, i32
  }
  func.func @transform_3(%arg0: i32) -> (i32, i32) {
    %c0_i32 = arith.constant 0 : i32
    %c0_i32_0 = arith.constant 0 : i32
    %c0_i32_1 = arith.constant 0 : i32
    return %c0_i32, %c0_i32_0 : i32, i32
  }
  func.func @transform_4(%arg0: i32) -> (i32, i32) {
    %c0_i32 = arith.constant 0 : i32
    %c0_i32_0 = arith.constant 0 : i32
    %c0_i32_1 = arith.constant 0 : i32
    return %c0_i32, %c0_i32_0 : i32, i32
  }
  func.func @transform_5(%arg0: i32) -> (i32, i32) {
    %c0_i32 = arith.constant 0 : i32
    %c0_i32_0 = arith.constant 0 : i32
    %c0_i32_1 = arith.constant 0 : i32
    return %c0_i32, %c0_i32_0 : i32, i32
  }
  func.func @transform_6(%arg0: i32) -> (i32, i32) {
    %c0_i32 = arith.constant 0 : i32
    %c0_i32_0 = arith.constant 0 : i32
    %c0_i32_1 = arith.constant 0 : i32
    return %c0_i32, %c0_i32_0 : i32, i32
  }
  func.func @transform_7(%arg0: i32) -> (i32, i32) {
    %c0_i32 = arith.constant 0 : i32
    %c0_i32_0 = arith.constant 0 : i32
    %c0_i32_1 = arith.constant 0 : i32
    return %c0_i32, %c0_i32_0 : i32, i32
  }
  func.func @transform_8(%arg0: i32) -> (i32, i32, i32) {
    %c0_i32 = arith.constant 0 : i32
    %c0_i32_0 = arith.constant 0 : i32
    %c0_i32_1 = arith.constant 0 : i32
    return %arg0, %c0_i32, %c0_i32_0 : i32, i32, i32
  }
}

</mosaic_0001>

<llo_original>
// kernel: delex_bilstm_forward.1
$region0: #{delex_bilstm_forward.1}
  #allocation0 [shape = 'u32[]', space=smem, size = 0x4, offset = 0x4, fixed_abs, tag = 'smem constant byte address 0x4 - core index']
  #allocation1 [shape = 'u32[144,128]{1,0:T(1,128)}', space=vmem, size = 0x12000, scoped, tag = 'internal scratch']
  #allocation2 [shape = 'f32[8,128]{1,0:T(8,128)}', space=vmem, size = 0x1000, scoped, tag = 'scratch operand']
  #allocation3 [shape = 'f32[8,128]{1,0:T(8,128)}', space=vmem, size = 0x1000, scoped, tag = 'scratch operand']
  %s0 = inlined_call_operand.vmem [shape: bf16[64,64], index: 0, kind: input, shape index: {}]
  %s1 = inlined_call_operand.vmem [shape: s32[8,128], index: 1, kind: input, shape index: {}]
  %s2 = inlined_call_operand.vmem [shape: s32[8,128], index: 2, kind: input, shape index: {}]
  %s3 = inlined_call_operand.vmem [shape: bf16[64,512], index: 3, kind: input, shape index: {}]
  %s4 = inlined_call_operand.vmem [shape: bf16[128,512], index: 4, kind: input, shape index: {}]
  %s5 = inlined_call_operand.vmem [shape: f32[1,512], index: 5, kind: input, shape index: {}]
  %s6 = inlined_call_operand.vmem [shape: f32[8,128], index: 6, kind: input, shape index: {}]
  %s7 = inlined_call_operand.vmem [shape: f32[8,128], index: 7, kind: input, shape index: {}]
  %s8 = inlined_call_operand.vmem [shape: f32[8,8,128], index: 8, kind: output, shape index: {}]
  %s9 = sld [smem:[#allocation0]]
  $region69: #{delex_bilstm_forward.1} parent=0
    _
  %s11 = ssub.s32 1, %s9
  %s12 = scalar_select 0, %s11, %s9
  loop: start=0, step=1, limit=4
  $region2: #{delex_bilstm_forward.1} parent=0 // loop_pre_header
    _
  $region3: #{delex_bilstm_forward.1} parent=0 // loop_header
    %s14 = sphi 0, %s18
    %p15 = scmp.ge.s32.totalorder %s14, 4
    %s24 = sphi 0, %s26
    %s27 = sphi 0, %s24
    %s28 = sphi 0, %s27
    %s44 = sphi 0, %s28
    %s48 = sphi 0, %s48
    %s50 = sphi 0, %s48
    %s51 = sphi 0, %s50
    %s65 = sphi 0, %s51
    %s69 = sphi 0, %s69
    %s71 = sphi 0, %s69
    %s72 = sphi 0, %s71
    %s86 = sphi 0, %s72
    %s90 = sphi 0, %s90
    %s92 = sphi 0, %s90
    %s93 = sphi 0, %s92
    %s107 = sphi 0, %s93
    %s111 = sphi 0, %s111
    %s113 = sphi 0, %s111
    %s114 = sphi 0, %s113
    %s128 = sphi 0, %s114
    %s132 = sphi 0, %s132
    %s134 = sphi 0, %s132
    %s135 = sphi 0, %s134
    %s149 = sphi 0, %s135
    %s153 = sphi 0, %s153
    %s155 = sphi 0, %s153
    %s156 = sphi 0, %s155
    %s170 = sphi 0, %s156
    %s174 = sphi 0, %s174
    %s176 = sphi 0, %s174
    %s177 = sphi 0, %s176
    %s191 = sphi 0, %s177
    %s197 = sphi 0, %s199
    %s200 = sphi 0, %s197
    %s201 = sphi 0, %s200
    %s217 = sphi 0, %s201
  $region4: #{delex_bilstm_forward.1} parent=0 // loop_header_branch
    %17 = sbr.rel (%p15) target = $region8
  $region5: #{delex_bilstm_forward.1} parent=0 // loop_body
    %s19 = ssub.s32 %s14, 1
    %s20 = ssub.s32 %s14, 2
    %s21 = sadd.s32 %s14, 1
    %s22 = ssub.s32 %s14, %s21
    %p23 = scmp.eq.s32.totalorder %s22, 0
    %s25 = sadd.s32 %s24, 1
    %s26 = scalar_select %p23, %s24, %s25
    %p29 = pneg %p23
    %p30 = scmp.eq.s32.totalorder %s14, 1
    %p31 = por %p29, %p30
    %p32 = scmp.ne.s32.totalorder %s24, %s27
    %p33 = scmp.eq.s32.totalorder %s14, 0
    %p34 = por %p32, %p33
    %p35 = scmp.ne.s32.totalorder %s24, %s27
    %p36 = scmp.eq.s32.totalorder %s19, 1
    %p37 = por %p35, %p36
    %p38 = scmp.ne.s32.totalorder %s27, %s28
    %p39 = scmp.eq.s32.totalorder %s19, 0
    %p40 = por %p38, %p39
    %p41 = scmp.ne.s32.totalorder %s27, %s28
    %p42 = scmp.eq.s32.totalorder %s20, 1
    %p43 = por %p41, %p42
    %p45 = scmp.ne.s32.totalorder %s28, %s44
    %p46 = scmp.eq.s32.totalorder %s20, 0
    %p47 = por %p45, %p46
    %s49 = sadd.s32 %s48, 1
    %p52 = scmp.eq.s32.totalorder %s14, 1
    %p53 = scmp.ne.s32.totalorder %s48, %s50
    %p54 = scmp.eq.s32.totalorder %s14, 0
    %p55 = por %p53, %p54
    %p56 = scmp.ne.s32.totalorder %s48, %s50
    %p57 = scmp.eq.s32.totalorder %s19, 1
    %p58 = por %p56, %p57
    %p59 = scmp.ne.s32.totalorder %s50, %s51
    %p60 = scmp.eq.s32.totalorder %s19, 0
    %p61 = por %p59, %p60
    %p62 = scmp.ne.s32.totalorder %s50, %s51
    %p63 = scmp.eq.s32.totalorder %s20, 1
    %p64 = por %p62, %p63
    %p66 = scmp.ne.s32.totalorder %s51, %s65
    %p67 = scmp.eq.s32.totalorder %s20, 0
    %p68 = por %p66, %p67
    %s70 = sadd.s32 %s69, 1
    %p73 = scmp.eq.s32.totalorder %s14, 1
    %p74 = scmp.ne.s32.totalorder %s69, %s71
    %p75 = scmp.eq.s32.totalorder %s14, 0
    %p76 = por %p74, %p75
    %p77 = scmp.ne.s32.totalorder %s69, %s71
    %p78 = scmp.eq.s32.totalorder %s19, 1
    %p79 = por %p77, %p78
    %p80 = scmp.ne.s32.totalorder %s71, %s72
    %p81 = scmp.eq.s32.totalorder %s19, 0
    %p82 = por %p80, %p81
    %p83 = scmp.ne.s32.totalorder %s71, %s72
    %p84 = scmp.eq.s32.totalorder %s20, 1
    %p85 = por %p83, %p84
    %p87 = scmp.ne.s32.totalorder %s72, %s86
    %p88 = scmp.eq.s32.totalorder %s20, 0
    %p89 = por %p87, %p88
    %s91 = sadd.s32 %s90, 1
    %p94 = scmp.eq.s32.totalorder %s14, 1
    %p95 = scmp.ne.s32.totalorder %s90, %s92
    %p96 = scmp.eq.s32.totalorder %s14, 0
    %p97 = por %p95, %p96
    %p98 = scmp.ne.s32.totalorder %s90, %s92
    %p99 = scmp.eq.s32.totalorder %s19, 1
    %p100 = por %p98, %p99
    %p101 = scmp.ne.s32.totalorder %s92, %s93
    %p102 = scmp.eq.s32.totalorder %s19, 0
    %p103 = por %p101, %p102
    %p104 = scmp.ne.s32.totalorder %s92, %s93
    %p105 = scmp.eq.s32.totalorder %s20, 1
    %p106 = por %p104, %p105
    %p108 = scmp.ne.s32.totalorder %s93, %s107
    %p109 = scmp.eq.s32.totalorder %s20, 0
    %p110 = por %p108, %p109
    %s112 = sadd.s32 %s111, 1
    %p115 = scmp.eq.s32.totalorder %s14, 1
    %p116 = scmp.ne.s32.totalorder %s111, %s113
    %p117 = scmp.eq.s32.totalorder %s14, 0
    %p118 = por %p116, %p117
    %p119 = scmp.ne.s32.totalorder %s111, %s113
    %p120 = scmp.eq.s32.totalorder %s19, 1
    %p121 = por %p119, %p120
    %p122 = scmp.ne.s32.totalorder %s113, %s114
    %p123 = scmp.eq.s32.totalorder %s19, 0
    %p124 = por %p122, %p123
    %p125 = scmp.ne.s32.totalorder %s113, %s114
    %p126 = scmp.eq.s32.totalorder %s20, 1
    %p127 = por %p125, %p126
    %p129 = scmp.ne.s32.totalorder %s114, %s128
    %p130 = scmp.eq.s32.totalorder %s20, 0
    %p131 = por %p129, %p130
    %s133 = sadd.s32 %s132, 1
    %p136 = scmp.eq.s32.totalorder %s14, 1
    %p137 = scmp.ne.s32.totalorder %s132, %s134
    %p138 = scmp.eq.s32.totalorder %s14, 0
    %p139 = por %p137, %p138
    %p140 = scmp.ne.s32.totalorder %s132, %s134
    %p141 = scmp.eq.s32.totalorder %s19, 1
    %p142 = por %p140, %p141
    %p143 = scmp.ne.s32.totalorder %s134, %s135
    %p144 = scmp.eq.s32.totalorder %s19, 0
    %p145 = por %p143, %p144
    %p146 = scmp.ne.s32.totalorder %s134, %s135
    %p147 = scmp.eq.s32.totalorder %s20, 1
    %p148 = por %p146, %p147
    %p150 = scmp.ne.s32.totalorder %s135, %s149
    %p151 = scmp.eq.s32.totalorder %s20, 0
    %p152 = por %p150, %p151
    %s154 = sadd.s32 %s153, 1
    %p157 = scmp.eq.s32.totalorder %s14, 1
    %p158 = scmp.ne.s32.totalorder %s153, %s155
    %p159 = scmp.eq.s32.totalorder %s14, 0
    %p160 = por %p158, %p159
    %p161 = scmp.ne.s32.totalorder %s153, %s155
    %p162 = scmp.eq.s32.totalorder %s19, 1
    %p163 = por %p161, %p162
    %p164 = scmp.ne.s32.totalorder %s155, %s156
    %p165 = scmp.eq.s32.totalorder %s19, 0
    %p166 = por %p164, %p165
    %p167 = scmp.ne.s32.totalorder %s155, %s156
    %p168 = scmp.eq.s32.totalorder %s20, 1
    %p169 = por %p167, %p168
    %p171 = scmp.ne.s32.totalorder %s156, %s170
    %p172 = scmp.eq.s32.totalorder %s20, 0
    %p173 = por %p171, %p172
    %s175 = sadd.s32 %s174, 1
    %p178 = scmp.eq.s32.totalorder %s14, 1
    %p179 = scmp.ne.s32.totalorder %s174, %s176
    %p180 = scmp.eq.s32.totalorder %s14, 0
    %p181 = por %p179, %p180
    %p182 = scmp.ne.s32.totalorder %s174, %s176
    %p183 = scmp.eq.s32.totalorder %s19, 1
    %p184 = por %p182, %p183
    %p185 = scmp.ne.s32.totalorder %s176, %s177
    %p186 = scmp.eq.s32.totalorder %s19, 0
    %p187 = por %p185, %p186
    %p188 = scmp.ne.s32.totalorder %s176, %s177
    %p189 = scmp.eq.s32.totalorder %s20, 1
    %p190 = por %p188, %p189
    %p192 = scmp.ne.s32.totalorder %s177, %s191
    %p193 = scmp.eq.s32.totalorder %s20, 0
    %p194 = por %p192, %p193
    %s195 = ssub.s32 %s14, %s21
    %p196 = scmp.eq.s32.totalorder %s195, 0
    %s198 = sadd.s32 %s197, 1
    %s199 = scalar_select %p196, %s197, %s198
    %p202 = pneg %p196
    %p203 = scmp.eq.s32.totalorder %s14, 1
    %p204 = por %p202, %p203
    %p205 = scmp.ne.s32.totalorder %s197, %s200
    %p206 = scmp.eq.s32.totalorder %s14, 0
    %p207 = por %p205, %p206
    %p208 = scmp.ne.s32.totalorder %s197, %s200
    %p209 = scmp.eq.s32.totalorder %s19, 1
    %p210 = por %p208, %p209
    %p211 = scmp.ne.s32.totalorder %s200, %s201
    %p212 = scmp.eq.s32.totalorder %s19, 0
    %p213 = por %p211, %p212
    %p214 = scmp.ne.s32.totalorder %s200, %s201
    %p215 = scmp.eq.s32.totalorder %s20, 1
    %p216 = por %p214, %p215
    %p218 = scmp.ne.s32.totalorder %s201, %s217
    %p219 = scmp.eq.s32.totalorder %s20, 0
    %p220 = por %p218, %p219
    %p221 = scmp.le.s32.totalorder 1, %s14
    %p222 = scmp.lt.s32.totalorder %s14, 3
    %p223 = pnand %p221, %p222
    %p224 = pneg %p223
    // Predicated region
    $region9: #{delex_bilstm_forward.1} parent=5 // pred_check
      _
    $region10: #{delex_bilstm_forward.1} parent=5 // pred_check_branch
      %226 = sbr.rel (%p223) target = $region12
    $region11: #{delex_bilstm_forward.1} parent=5 // pred_region
      %s227 = ssub.s32 %s14, 1
      // Predicated region
      $region13: #{delex_bilstm_forward.1} parent=11 // pred_check
        %p228 = pneg %p61
      $region14: #{delex_bilstm_forward.1} parent=11 // pred_check_branch
        %230 = sbr.rel (%p228) target = $region16
      $region15: #{delex_bilstm_forward.1} parent=11 // pred_region
        _
      $region16: #{delex_bilstm_forward.1} parent=11 // pred_fallthru
        _
      // Predicated region
      $region17: #{delex_bilstm_forward.1} parent=11 // pred_check
        %p231 = pneg %p82
      $region18: #{delex_bilstm_forward.1} parent=11 // pred_check_branch
        %233 = sbr.rel (%p231) target = $region20
      $region19: #{delex_bilstm_forward.1} parent=11 // pred_region
        _
      $region20: #{delex_bilstm_forward.1} parent=11 // pred_fallthru
        _
      // Predicated region
      $region21: #{delex_bilstm_forward.1} parent=11 // pred_check
        %p234 = pneg %p103
      $region22: #{delex_bilstm_forward.1} parent=11 // pred_check_branch
        %236 = sbr.rel (%p234) target = $region24
      $region23: #{delex_bilstm_forward.1} parent=11 // pred_region
        _
      $region24: #{delex_bilstm_forward.1} parent=11 // pred_fallthru
        _
      // Predicated region
      $region25: #{delex_bilstm_forward.1} parent=11 // pred_check
        %p237 = pneg %p124
      $region26: #{delex_bilstm_forward.1} parent=11 // pred_check_branch
        %239 = sbr.rel (%p237) target = $region28
      $region27: #{delex_bilstm_forward.1} parent=11 // pred_region
        _
      $region28: #{delex_bilstm_forward.1} parent=11 // pred_fallthru
        _
      // Predicated region
      $region29: #{delex_bilstm_forward.1} parent=11 // pred_check
        %p240 = pneg %p145
      $region30: #{delex_bilstm_forward.1} parent=11 // pred_check_branch
        %242 = sbr.rel (%p240) target = $region32
      $region31: #{delex_bilstm_forward.1} parent=11 // pred_region
        _
      $region32: #{delex_bilstm_forward.1} parent=11 // pred_fallthru
        _
      // Predicated region
      $region33: #{delex_bilstm_forward.1} parent=11 // pred_check
        %p243 = pneg %p166
      $region34: #{delex_bilstm_forward.1} parent=11 // pred_check_branch
        %245 = sbr.rel (%p243) target = $region36
      $region35: #{delex_bilstm_forward.1} parent=11 // pred_region
        _
      $region36: #{delex_bilstm_forward.1} parent=11 // pred_fallthru
        _
      // Predicated region
      $region37: #{delex_bilstm_forward.1} parent=11 // pred_check
        %p246 = pneg %p187
      $region38: #{delex_bilstm_forward.1} parent=11 // pred_check_branch
        %248 = sbr.rel (%p246) target = $region40
      $region39: #{delex_bilstm_forward.1} parent=11 // pred_region
        _
      $region40: #{delex_bilstm_forward.1} parent=11 // pred_fallthru
        _
    $region12: #{delex_bilstm_forward.1} parent=5 // pred_fallthru
      _
    %p249 = scmp.lt.s32.totalorder %s14, 2
    // Predicated region
    $region41: #{delex_bilstm_forward.1} parent=5 // pred_check
      %p250 = pneg %p249
    $region42: #{delex_bilstm_forward.1} parent=5 // pred_check_branch
      %252 = sbr.rel (%p250) target = $region44
    $region43: #{delex_bilstm_forward.1} parent=5 // pred_region
      // Predicated region
      $region45: #{delex_bilstm_forward.1} parent=43 // pred_check
        %p253 = pneg %p34
      $region46: #{delex_bilstm_forward.1} parent=43 // pred_check_branch
        %255 = sbr.rel (%p253) target = $region48
      $region47: #{delex_bilstm_forward.1} parent=43 // pred_region
        %s256 = smul.u32 4, %s14
        %p257 = scmp.lt.s32.totalorder %s256, 7
        %s258 = scalar_select %p257, %s256, 7
        %s259 = smul.addr %s258, 4
        %s260 = scalar_lea.vmem %s0, %s259
        %s261 = smul.u32 4, %s14
      $region48: #{delex_bilstm_forward.1} parent=43 // pred_fallthru
        _
    $region44: #{delex_bilstm_forward.1} parent=5 // pred_fallthru
      _
    %p262 = scmp.le.s32.totalorder 1, %s14
    %p263 = scmp.lt.s32.totalorder %s14, 3
    %p264 = pnand %p262, %p263
    %p265 = pneg %p264
    // Predicated region
    $region49: #{delex_bilstm_forward.1} parent=5 // pred_check
      _
    $region50: #{delex_bilstm_forward.1} parent=5 // pred_check_branch
      %267 = sbr.rel (%p264) target = $region52
    $region51: #{delex_bilstm_forward.1} parent=5 // pred_region
      %s268 = ssub.s32 %s14, 1
      %s269 = smul.u32 4, %s19
      %p270 = scmp.lt.s32.totalorder %s269, 7
      %s271 = scalar_select %p270, %s269, 7
      %s272 = smul.addr %s271, 4
      %s273 = scalar_lea.vmem %s0, %s272
      %p274 = pneg %p40
      %p275 = pneg %p37
      %p276 = pneg %p61
      %p277 = pneg %p58
      %p278 = pneg %p82
      %p279 = pneg %p79
      %p280 = pneg %p103
      %p281 = pneg %p100
      %p282 = pneg %p124
      %p283 = pneg %p121
      %p284 = pneg %p145
      %p285 = pneg %p142
      %p286 = pneg %p166
      %p287 = pneg %p163
      %p288 = pneg %p187
      %p289 = pneg %p184
      %p290 = pneg %p213
      %p291 = pneg %p210
      %s292 = smul.u32 4, %s19
      %p293 = scmp.lt.s32.totalorder %s292, 7
      %s294 = scalar_select %p293, %s292, 7
      %s295 = smul.addr %s294, 8
      %s296 = scalar_lea.vmem %s8, %s295
      %s297 = smul.u32 4, %s19
      %p298 = scmp.lt.s32.totalorder %s297, 7
      %s299 = scalar_select %p298, %s297, 7
      %s300 = smul.addr %s299, 4
      %s301 = scalar_lea.vmem %s0, %s300
      %s302 = smul.u32 4, %s19
      %s303 = smul.u32 4, %s19
      %p304 = scmp.lt.s32.totalorder %s303, 7
      %s305 = scalar_select %p304, %s303, 7
      %s306 = smul.addr %s305, 8
      %s307 = scalar_lea.vmem %s8, %s306
      %s308 = smul.u32 4, %s19
      %p310 = scmp.eq.s32.totalorder %s19, 0
      // Predicated region
      $region53: #{delex_bilstm_forward.1} parent=51 // pred_check
        %p311 = pneg %p310
      $region54: #{delex_bilstm_forward.1} parent=51 // pred_check_branch
        %313 = sbr.rel (%p311) target = $region56
      $region55: #{delex_bilstm_forward.1} parent=51 // pred_region
        %v314 = vld [vmem:[%s6] sm:$0xff]
        %315 = vst [vmem:[#allocation2] sm:$0xff] %v314
        %v316 = vld [vmem:[%s7] sm:$0xff]
        %317 = vst [vmem:[#allocation3] sm:$0xff] %v316
      $region56: #{delex_bilstm_forward.1} parent=51 // pred_fallthru
        _
      %v318 = vld [vmem:[%s301] sm:$0xf]
      %v319 = vld [vmem:[%s301 + $0x4] sm:$0xf]
      %v320 = vld [vmem:[%s301 + $0x8] sm:$0xf]
      %v321 = vld [vmem:[%s301 + $0xc] sm:$0xf]
      %v322 = vld [vmem:[%s3] sm:$0xff]
      %v323 = vld [vmem:[%s3 + $0x8] sm:$0xff]
      %v324 = vld [vmem:[%s3 + $0x10] sm:$0xff]
      %v325 = vld [vmem:[%s3 + $0x18] sm:$0xff]
      %v326 = vld [vmem:[%s3 + $0x20] sm:$0xff]
      %v327 = vld [vmem:[%s3 + $0x28] sm:$0xff]
      %v328 = vld [vmem:[%s3 + $0x30] sm:$0xff]
      %v329 = vld [vmem:[%s3 + $0x38] sm:$0xff]
      %v330 = vld [vmem:[%s3 + $0x40] sm:$0xff]
      %v331 = vld [vmem:[%s3 + $0x48] sm:$0xff]
      %v332 = vld [vmem:[%s3 + $0x50] sm:$0xff]
      %v333 = vld [vmem:[%s3 + $0x58] sm:$0xff]
      %v334 = vld [vmem:[%s3 + $0x60] sm:$0xff]
      %v335 = vld [vmem:[%s3 + $0x68] sm:$0xff]
      %v336 = vld [vmem:[%s3 + $0x70] sm:$0xff]
      %v337 = vld [vmem:[%s3 + $0x78] sm:$0xff]
      %v338 = vld [vmem:[%s5] sm:$0xf]
      %v340 = vlaneseq
      %v341 = vshrl.u32 %v340, 7
      %v342 = vsub.s32 0, %v341
      %v343 = vrot.slane %v338, %v342
      %v344 = vlaneseq
      %v345 = vshrl.u32 %v344, 7
      %v346 = vsub.s32 1, %v345
      %v347 = vrot.slane %v338, %v346
      %v348 = vlaneseq
      %v349 = vshrl.u32 %v348, 7
      %v350 = vsub.s32 2, %v349
      %v351 = vrot.slane %v338, %v350
      %v352 = vlaneseq
      %v353 = vshrl.u32 %v352, 7
      %v354 = vsub.s32 3, %v353
      %v355 = vrot.slane %v338, %v354
      %v364 = vunpack.c.l.b16 %v318
      %v365 = vunpack.c.l.b16 %v319
      %v366 = vunpack.c.l.b16 %v320
      %v367 = vunpack.c.l.b16 %v321
      %v368 = vpack.c.b16 %v365, %v364
      %v369 = vpack.c.b16 %v367, %v366
      %v386 = vunpack.c.l.b16 %v322
      %v387 = vunpack.c.h.b16 %v322
      %v388 = vunpack.c.l.b16 %v323
      %v389 = vunpack.c.h.b16 %v323
      %v390 = vunpack.c.l.b16 %v324
      %v391 = vunpack.c.h.b16 %v324
      %v392 = vunpack.c.l.b16 %v325
      %v393 = vunpack.c.h.b16 %v325
      %v394 = vunpack.c.l.b16 %v326
      %v395 = vunpack.c.h.b16 %v326
      %v396 = vunpack.c.l.b16 %v327
      %v397 = vunpack.c.h.b16 %v327
      %v398 = vunpack.c.l.b16 %v328
      %v399 = vunpack.c.h.b16 %v328
      %v400 = vunpack.c.l.b16 %v329
      %v401 = vunpack.c.h.b16 %v329
      %v402 = vunpack.c.l.b16 %v330
      %v403 = vunpack.c.h.b16 %v330
      %v404 = vunpack.c.l.b16 %v331
      %v405 = vunpack.c.h.b16 %v331
      %v406 = vunpack.c.l.b16 %v332
      %v407 = vunpack.c.h.b16 %v332
      %v408 = vunpack.c.l.b16 %v333
      %v409 = vunpack.c.h.b16 %v333
      %v410 = vunpack.c.l.b16 %v334
      %v411 = vunpack.c.h.b16 %v334
      %v412 = vunpack.c.l.b16 %v335
      %v413 = vunpack.c.h.b16 %v335
      %v414 = vunpack.c.l.b16 %v336
      %v415 = vunpack.c.h.b16 %v336
      %v416 = vunpack.c.l.b16 %v337
      %v417 = vunpack.c.h.b16 %v337
      %v418 = vpack.c.b16 %v390, %v386
      %v419 = vpack.c.b16 %v391, %v387
      %v420 = vpack.c.b16 %v392, %v388
      %v421 = vpack.c.b16 %v393, %v389
      %v422 = vpack.c.b16 %v398, %v394
      %v423 = vpack.c.b16 %v399, %v395
      %v424 = vpack.c.b16 %v400, %v396
      %v425 = vpack.c.b16 %v401, %v397
      %v426 = vpack.c.b16 %v406, %v402
      %v427 = vpack.c.b16 %v407, %v403
      %v428 = vpack.c.b16 %v408, %v404
      %v429 = vpack.c.b16 %v409, %v405
      %v430 = vpack.c.b16 %v414, %v410
      %v431 = vpack.c.b16 %v415, %v411
      %v432 = vpack.c.b16 %v416, %v412
      %v433 = vpack.c.b16 %v417, %v413
      %vm450 = vcmask 523264
      %v452 = vsel %vm450, %v368, 0
      %v455 = vsel %vm450, %v369, 0
      %457 = vmatprep.subr.bf16.mxu0 %v419
      %458 = vmatpush1.bf16.msra.mxu0 %v418
      %459 = vmatprep.subr.bf16.mxu0 %v423
      %460 = vmatpush1.bf16.msra.mxu0 %v422
      %461 = vmatprep.subr.bf16.mxu0 %v427
      %462 = vmatpush1.bf16.msra.mxu0 %v426
      %463 = vmatprep.subr.bf16.mxu0 %v431
      %464 = vmatpush1.bf16.msra.mxu0 %v430
      %465 = vmatprep.subr.bf16.mxu0 0
      %466 = vmatpush1.bf16.msra.mxu0 0
      %467 = vmatprep.subr.bf16.mxu0 0
      %468 = vmatpush1.bf16.msra.mxu0 0
      %469 = vmatprep.subr.bf16.mxu0 0
      %470 = vmatpush1.bf16.msra.mxu0 0
      %471 = vmatprep.subr.bf16.mxu0 0
      %472 = vmatpush1.bf16.msra.mxu0 0
      %473 = vmatprep.subr.bf16.mxu0 0
      %474 = vmatpush1.bf16.msra.mxu0 0
      %475 = vmatprep.subr.bf16.mxu0 0
      %476 = vmatpush1.bf16.msra.mxu0 0
      %477 = vmatprep.subr.bf16.mxu0 0
      %478 = vmatpush1.bf16.msra.mxu0 0
      %479 = vmatprep.subr.bf16.mxu0 0
      %480 = vmatpush1.bf16.msra.mxu0 0
      %481 = vmatprep.subr.bf16.mxu0 0
      %482 = vmatpush1.bf16.msra.mxu0 0
      %483 = vmatprep.subr.bf16.mxu0 0
      %484 = vmatpush1.bf16.msra.mxu0 0
      %485 = vmatprep.subr.bf16.mxu0 0
      %486 = vmatpush1.bf16.msra.mxu0 0
      %487 = vmatprep.subr.bf16.mxu0 0
      %488 = vmatpush1.bf16.msra.mxu0 0
      %489 = vmatprep.mubr.bf16.mxu0 0
      %490 = vmatmul.mubr.bf16.gmra.mrb[0].mxu0 %v452
      %v491 = vpop.f32.mrb[0].mxu0
      %v492 = vadd.f32 %v343, %v491
      %v493 = vpop.f32.mrb[0].mxu0
      %v494 = vadd.f32 %v347, %v493
      %v495 = vpop.f32.mrb[0].mxu0
      %v496 = vadd.f32 %v343, %v495
      %v497 = vpop.f32.mrb[0].mxu0
      %v498 = vadd.f32 %v347, %v497
      %499 = vmatprep.mubr.bf16.mxu0 0
      %500 = vmatmul.mubr.bf16.gmra.mrb[0].mxu0 %v455
      %v501 = vpop.f32.mrb[0].mxu0
      %v502 = vadd.f32 %v343, %v501
      %v503 = vpop.f32.mrb[0].mxu0
      %v504 = vadd.f32 %v347, %v503
      %v505 = vpop.f32.mrb[0].mxu0
      %v506 = vadd.f32 %v343, %v505
      %v507 = vpop.f32.mrb[0].mxu0
      %v508 = vadd.f32 %v347, %v507
      %509 = vdwg.mxu0
      %510 = vmatprep.subr.bf16.mxu0 %v421
      %511 = vmatpush1.bf16.msra.mxu0 %v420
      %512 = vmatprep.subr.bf16.mxu0 %v425
      %513 = vmatpush1.bf16.msra.mxu0 %v424
      %514 = vmatprep.subr.bf16.mxu0 %v429
      %515 = vmatpush1.bf16.msra.mxu0 %v428
      %516 = vmatprep.subr.bf16.mxu0 %v433
      %517 = vmatpush1.bf16.msra.mxu0 %v432
      %518 = vmatprep.subr.bf16.mxu0 0
      %519 = vmatpush1.bf16.msra.mxu0 0
      %520 = vmatprep.subr.bf16.mxu0 0
      %521 = vmatpush1.bf16.msra.mxu0 0
      %522 = vmatprep.subr.bf16.mxu0 0
      %523 = vmatpush1.bf16.msra.mxu0 0
      %524 = vmatprep.subr.bf16.mxu0 0
      %525 = vmatpush1.bf16.msra.mxu0 0
      %526 = vmatprep.subr.bf16.mxu0 0
      %527 = vmatpush1.bf16.msra.mxu0 0
      %528 = vmatprep.subr.bf16.mxu0 0
      %529 = vmatpush1.bf16.msra.mxu0 0
      %530 = vmatprep.subr.bf16.mxu0 0
      %531 = vmatpush1.bf16.msra.mxu0 0
      %532 = vmatprep.subr.bf16.mxu0 0
      %533 = vmatpush1.bf16.msra.mxu0 0
      %534 = vmatprep.subr.bf16.mxu0 0
      %535 = vmatpush1.bf16.msra.mxu0 0
      %536 = vmatprep.subr.bf16.mxu0 0
      %537 = vmatpush1.bf16.msra.mxu0 0
      %538 = vmatprep.subr.bf16.mxu0 0
      %539 = vmatpush1.bf16.msra.mxu0 0
      %540 = vmatprep.subr.bf16.mxu0 0
      %541 = vmatpush1.bf16.msra.mxu0 0
      %542 = vmatprep.mubr.bf16.mxu0 0
      %543 = vmatmul.mubr.bf16.gmra.mrb[0].mxu0 %v452
      %v544 = vpop.f32.mrb[0].mxu0
      %v545 = vadd.f32 %v351, %v544
      %v546 = vpop.f32.mrb[0].mxu0
      %v547 = vadd.f32 %v355, %v546
      %v548 = vpop.f32.mrb[0].mxu0
      %v549 = vadd.f32 %v351, %v548
      %v550 = vpop.f32.mrb[0].mxu0
      %v551 = vadd.f32 %v355, %v550
      %552 = vmatprep.mubr.bf16.mxu0 0
      %553 = vmatmul.mubr.bf16.gmra.mrb[0].mxu0 %v455
      %v554 = vpop.f32.mrb[0].mxu0
      %v555 = vadd.f32 %v351, %v554
      %v556 = vpop.f32.mrb[0].mxu0
      %v557 = vadd.f32 %v355, %v556
      %v558 = vpop.f32.mrb[0].mxu0
      %v559 = vadd.f32 %v351, %v558
      %v560 = vpop.f32.mrb[0].mxu0
      %v561 = vadd.f32 %v355, %v560
      %562 = vdwg.mxu0
      %v563 = vld [vmem:[%s1] sm:$0xff]
      %v564 = vld [vmem:[%s2] sm:$0xff]
      %v565 = vld [vmem:[%s4] sm:$0xff]
      %v566 = vld [vmem:[%s4 + $0x8] sm:$0xff]
      %v567 = vld [vmem:[%s4 + $0x10] sm:$0xff]
      %v568 = vld [vmem:[%s4 + $0x18] sm:$0xff]
      %v569 = vld [vmem:[%s4 + $0x20] sm:$0xff]
      %v570 = vld [vmem:[%s4 + $0x28] sm:$0xff]
      %v571 = vld [vmem:[%s4 + $0x30] sm:$0xff]
      %v572 = vld [vmem:[%s4 + $0x38] sm:$0xff]
      %v573 = vld [vmem:[%s4 + $0x40] sm:$0xff]
      %v574 = vld [vmem:[%s4 + $0x48] sm:$0xff]
      %v575 = vld [vmem:[%s4 + $0x50] sm:$0xff]
      %v576 = vld [vmem:[%s4 + $0x58] sm:$0xff]
      %v577 = vld [vmem:[%s4 + $0x60] sm:$0xff]
      %v578 = vld [vmem:[%s4 + $0x68] sm:$0xff]
      %v579 = vld [vmem:[%s4 + $0x70] sm:$0xff]
      %v580 = vld [vmem:[%s4 + $0x78] sm:$0xff]
      %v581 = vld [vmem:[%s4 + $0x80] sm:$0xff]
      %v582 = vld [vmem:[%s4 + $0x88] sm:$0xff]
      %v583 = vld [vmem:[%s4 + $0x90] sm:$0xff]
      %v584 = vld [vmem:[%s4 + $0x98] sm:$0xff]
      %v585 = vld [vmem:[%s4 + $0xa0] sm:$0xff]
      %v586 = vld [vmem:[%s4 + $0xa8] sm:$0xff]
      %v587 = vld [vmem:[%s4 + $0xb0] sm:$0xff]
      %v588 = vld [vmem:[%s4 + $0xb8] sm:$0xff]
      %v589 = vld [vmem:[%s4 + $0xc0] sm:$0xff]
      %v590 = vld [vmem:[%s4 + $0xc8] sm:$0xff]
      %v591 = vld [vmem:[%s4 + $0xd0] sm:$0xff]
      %v592 = vld [vmem:[%s4 + $0xd8] sm:$0xff]
      %v593 = vld [vmem:[%s4 + $0xe0] sm:$0xff]
      %v594 = vld [vmem:[%s4 + $0xe8] sm:$0xff]
      %v595 = vld [vmem:[%s4 + $0xf0] sm:$0xff]
      %v596 = vld [vmem:[%s4 + $0xf8] sm:$0xff]
      %v597 = vld [vmem:[#allocation2] sm:$0xff]
      %v598 = vld [vmem:[#allocation3] sm:$0xff]
      %s599 = smul.u32 %s19, 4
      %v600 = vpack.c.bf16 %v597, %v597
      %v633 = vunpack.c.l.b16 %v565
      %v634 = vunpack.c.h.b16 %v565
      %v635 = vunpack.c.l.b16 %v566
      %v636 = vunpack.c.h.b16 %v566
      %v637 = vunpack.c.l.b16 %v567
      %v638 = vunpack.c.h.b16 %v567
      %v639 = vunpack.c.l.b16 %v568
      %v640 = vunpack.c.h.b16 %v568
      %v641 = vunpack.c.l.b16 %v569
      %v642 = vunpack.c.h.b16 %v569
      %v643 = vunpack.c.l.b16 %v570
      %v644 = vunpack.c.h.b16 %v570
      %v645 = vunpack.c.l.b16 %v571
      %v646 = vunpack.c.h.b16 %v571
      %v647 = vunpack.c.l.b16 %v572
      %v648 = vunpack.c.h.b16 %v572
      %v649 = vunpack.c.l.b16 %v573
      %v650 = vunpack.c.h.b16 %v573
      %v651 = vunpack.c.l.b16 %v574
      %v652 = vunpack.c.h.b16 %v574
      %v653 = vunpack.c.l.b16 %v575
      %v654 = vunpack.c.h.b16 %v575
      %v655 = vunpack.c.l.b16 %v576
      %v656 = vunpack.c.h.b16 %v576
      %v657 = vunpack.c.l.b16 %v577
      %v658 = vunpack.c.h.b16 %v577
      %v659 = vunpack.c.l.b16 %v578
      %v660 = vunpack.c.h.b16 %v578
      %v661 = vunpack.c.l.b16 %v579
      %v662 = vunpack.c.h.b16 %v579
      %v663 = vunpack.c.l.b16 %v580
      %v664 = vunpack.c.h.b16 %v580
      %v665 = vunpack.c.l.b16 %v581
      %v666 = vunpack.c.h.b16 %v581
      %v667 = vunpack.c.l.b16 %v582
      %v668 = vunpack.c.h.b16 %v582
      %v669 = vunpack.c.l.b16 %v583
      %v670 = vunpack.c.h.b16 %v583
      %v671 = vunpack.c.l.b16 %v584
      %v672 = vunpack.c.h.b16 %v584
      %v673 = vunpack.c.l.b16 %v585
      %v674 = vunpack.c.h.b16 %v585
      %v675 = vunpack.c.l.b16 %v586
      %v676 = vunpack.c.h.b16 %v586
      %v677 = vunpack.c.l.b16 %v587
      %v678 = vunpack.c.h.b16 %v587
      %v679 = vunpack.c.l.b16 %v588
      %v680 = vunpack.c.h.b16 %v588
      %v681 = vunpack.c.l.b16 %v589
      %v682 = vunpack.c.h.b16 %v589
      %v683 = vunpack.c.l.b16 %v590
      %v684 = vunpack.c.h.b16 %v590
      %v685 = vunpack.c.l.b16 %v591
      %v686 = vunpack.c.h.b16 %v591
      %v687 = vunpack.c.l.b16 %v592
      %v688 = vunpack.c.h.b16 %v592
      %v689 = vunpack.c.l.b16 %v593
      %v690 = vunpack.c.h.b16 %v593
      %v691 = vunpack.c.l.b16 %v594
      %v692 = vunpack.c.h.b16 %v594
      %v693 = vunpack.c.l.b16 %v595
      %v694 = vunpack.c.h.b16 %v595
      %v695 = vunpack.c.l.b16 %v596
      %v696 = vunpack.c.h.b16 %v596
      %v697 = vpack.c.b16 %v637, %v633
      %v698 = vpack.c.b16 %v638, %v634
      %v699 = vpack.c.b16 %v639, %v635
      %v700 = vpack.c.b16 %v640, %v636
      %v701 = vpack.c.b16 %v645, %v641
      %v702 = vpack.c.b16 %v646, %v642
      %v703 = vpack.c.b16 %v647, %v643
      %v704 = vpack.c.b16 %v648, %v644
      %v705 = vpack.c.b16 %v653, %v649
      %v706 = vpack.c.b16 %v654, %v650
      %v707 = vpack.c.b16 %v655, %v651
      %v708 = vpack.c.b16 %v656, %v652
      %v709 = vpack.c.b16 %v661, %v657
      %v710 = vpack.c.b16 %v662, %v658
      %v711 = vpack.c.b16 %v663, %v659
      %v712 = vpack.c.b16 %v664, %v660
      %v713 = vpack.c.b16 %v669, %v665
      %v714 = vpack.c.b16 %v670, %v666
      %v715 = vpack.c.b16 %v671, %v667
      %v716 = vpack.c.b16 %v672, %v668
      %v717 = vpack.c.b16 %v677, %v673
      %v718 = vpack.c.b16 %v678, %v674
      %v719 = vpack.c.b16 %v679, %v675
      %v720 = vpack.c.b16 %v680, %v676
      %v721 = vpack.c.b16 %v685, %v681
      %v722 = vpack.c.b16 %v686, %v682
      %v723 = vpack.c.b16 %v687, %v683
      %v724 = vpack.c.b16 %v688, %v684
      %v725 = vpack.c.b16 %v693, %v689
      %v726 = vpack.c.b16 %v694, %v690
      %v727 = vpack.c.b16 %v695, %v691
      %v728 = vpack.c.b16 %v696, %v692
      %761 = vmatprep.subr.bf16.mxu0 %v698
      %762 = vmatpush1.bf16.msra.mxu0 %v697
      %763 = vmatprep.subr.bf16.mxu0 %v702
      %764 = vmatpush1.bf16.msra.mxu0 %v701
      %765 = vmatprep.subr.bf16.mxu0 %v706
      %766 = vmatpush1.bf16.msra.mxu0 %v705
      %767 = vmatprep.subr.bf16.mxu0 %v710
      %768 = vmatpush1.bf16.msra.mxu0 %v709
      %769 = vmatprep.subr.bf16.mxu0 %v714
      %770 = vmatpush1.bf16.msra.mxu0 %v713
      %771 = vmatprep.subr.bf16.mxu0 %v718
      %772 = vmatpush1.bf16.msra.mxu0 %v717
      %773 = vmatprep.subr.bf16.mxu0 %v722
      %774 = vmatpush1.bf16.msra.mxu0 %v721
      %775 = vmatprep.subr.bf16.mxu0 %v726
      %776 = vmatpush1.bf16.msra.mxu0 %v725
      %777 = vmatprep.subr.bf16.mxu0 0
      %778 = vmatpush1.bf16.msra.mxu0 0
      %779 = vmatprep.subr.bf16.mxu0 0
      %780 = vmatpush1.bf16.msra.mxu0 0
      %781 = vmatprep.subr.bf16.mxu0 0
      %782 = vmatpush1.bf16.msra.mxu0 0
      %783 = vmatprep.subr.bf16.mxu0 0
      %784 = vmatpush1.bf16.msra.mxu0 0
      %785 = vmatprep.subr.bf16.mxu0 0
      %786 = vmatpush1.bf16.msra.mxu0 0
      %787 = vmatprep.subr.bf16.mxu0 0
      %788 = vmatpush1.bf16.msra.mxu0 0
      %789 = vmatprep.subr.bf16.mxu0 0
      %790 = vmatpush1.bf16.msra.mxu0 0
      %791 = vmatprep.subr.bf16.mxu0 0
      %792 = vmatpush1.bf16.msra.mxu0 0
      %793 = vmatprep.mubr.bf16.mxu0 0
      %794 = vmatmul.mubr.bf16.gmra.mrb[0].mxu0 %v600
      %v795 = vpop.f32.mrb[0].mxu0
      %v796 = vadd.f32 0.0, %v795
      %v797 = vpop.f32.mrb[0].mxu0
      %v798 = vadd.f32 0.0, %v797
      %v799 = vpop.f32.mrb[0].mxu0
      %v800 = vpop.f32.mrb[0].mxu0
      %801 = vdwg.mxu0
      %802 = vmatprep.subr.bf16.mxu0 %v700
      %803 = vmatpush1.bf16.msra.mxu0 %v699
      %804 = vmatprep.subr.bf16.mxu0 %v704
      %805 = vmatpush1.bf16.msra.mxu0 %v703
      %806 = vmatprep.subr.bf16.mxu0 %v708
      %807 = vmatpush1.bf16.msra.mxu0 %v707
      %808 = vmatprep.subr.bf16.mxu0 %v712
      %809 = vmatpush1.bf16.msra.mxu0 %v711
      %810 = vmatprep.subr.bf16.mxu0 %v716
      %811 = vmatpush1.bf16.msra.mxu0 %v715
      %812 = vmatprep.subr.bf16.mxu0 %v720
      %813 = vmatpush1.bf16.msra.mxu0 %v719
      %814 = vmatprep.subr.bf16.mxu0 %v724
      %815 = vmatpush1.bf16.msra.mxu0 %v723
      %816 = vmatprep.subr.bf16.mxu0 %v728
      %817 = vmatpush1.bf16.msra.mxu0 %v727
      %818 = vmatprep.subr.bf16.mxu0 0
      %819 = vmatpush1.bf16.msra.mxu0 0
      %820 = vmatprep.subr.bf16.mxu0 0
      %821 = vmatpush1.bf16.msra.mxu0 0
      %822 = vmatprep.subr.bf16.mxu0 0
      %823 = vmatpush1.bf16.msra.mxu0 0
      %824 = vmatprep.subr.bf16.mxu0 0
      %825 = vmatpush1.bf16.msra.mxu0 0
      %826 = vmatprep.subr.bf16.mxu0 0
      %827 = vmatpush1.bf16.msra.mxu0 0
      %828 = vmatprep.subr.bf16.mxu0 0
      %829 = vmatpush1.bf16.msra.mxu0 0
      %830 = vmatprep.subr.bf16.mxu0 0
      %831 = vmatpush1.bf16.msra.mxu0 0
      %832 = vmatprep.subr.bf16.mxu0 0
      %833 = vmatpush1.bf16.msra.mxu0 0
      %834 = vmatprep.mubr.bf16.mxu0 0
      %835 = vmatmul.mubr.bf16.gmra.mrb[0].mxu0 %v600
      %v836 = vpop.f32.mrb[0].mxu0
      %v837 = vadd.f32 0.0, %v836
      %v838 = vpop.f32.mrb[0].mxu0
      %v839 = vadd.f32 0.0, %v838
      %v840 = vpop.f32.mrb[0].mxu0
      %v841 = vpop.f32.mrb[0].mxu0
      %842 = vdwg.mxu0
      %v843 = vadd.f32 %v492, %v796
      %v844 = vadd.f32 %v494, %v798
      %v845 = vadd.f32 %v545, %v837
      %v846 = vadd.f32 %v547, %v839
      %v847 = vxor.u32 %v843, 2147483648
      %v848 = vmul.f32 %v847, 1.442695
      %v849 = vpow.pop %v848
      %v850 = vadd.f32 %v849, 1.0
      %v851 = vrcp.pop %v850
      %v852 = vmul.f32 1.0, %v851
      %v853 = vxor.u32 %v844, 2147483648
      %v854 = vmul.f32 %v853, 1.442695
      %v855 = vpow.pop %v854
      %v856 = vadd.f32 %v855, 1.0
      %v857 = vrcp.pop %v856
      %v858 = vmul.f32 1.0, %v857
      %v859 = vtanh.pop %v845
      %v860 = vxor.u32 %v846, 2147483648
      %v861 = vmul.f32 %v860, 1.442695
      %v862 = vpow.pop %v861
      %v863 = vadd.f32 %v862, 1.0
      %v864 = vrcp.pop %v863
      %v865 = vmul.f32 1.0, %v864
      %v866 = vmul.f32 %v858, %v598
      %v867 = vmul.f32 %v852, %v859
      %v868 = vadd.f32 %v866, %v867
      %v869 = vtanh.pop %v868
      %v870 = vmul.f32 %v865, %v869
      %v871 = vstv %s599
      %vm872 = vcmp.ge.s32.totalorder %v871, %v563
      %vm873 = vcmp.lt.s32.totalorder %v871, %v564
      %vm874 = vmand %vm872, %vm873
      %v875 = vsel %vm874, %v870, %v597
      %v876 = vsel %vm874, %v868, %v598
      %v877 = vsel %vm874, %v870, 0.0
      %878 = vst [vmem:[%s307] sm:$0xff] %v877
      %s879 = sadd.s32 %s599, 1
      %v880 = vpack.c.bf16 %v875, %v875
      %881 = vmatprep.subr.bf16.mxu0 %v698
      %882 = vmatpush1.bf16.msra.mxu0 %v697
      %883 = vmatprep.subr.bf16.mxu0 %v702
      %884 = vmatpush1.bf16.msra.mxu0 %v701
      %885 = vmatprep.subr.bf16.mxu0 %v706
      %886 = vmatpush1.bf16.msra.mxu0 %v705
      %887 = vmatprep.subr.bf16.mxu0 %v710
      %888 = vmatpush1.bf16.msra.mxu0 %v709
      %889 = vmatprep.subr.bf16.mxu0 %v714
      %890 = vmatpush1.bf16.msra.mxu0 %v713
      %891 = vmatprep.subr.bf16.mxu0 %v718
      %892 = vmatpush1.bf16.msra.mxu0 %v717
      %893 = vmatprep.subr.bf16.mxu0 %v722
      %894 = vmatpush1.bf16.msra.mxu0 %v721
      %895 = vmatprep.subr.bf16.mxu0 %v726
      %896 = vmatpush1.bf16.msra.mxu0 %v725
      %897 = vmatprep.subr.bf16.mxu0 0
      %898 = vmatpush1.bf16.msra.mxu0 0
      %899 = vmatprep.subr.bf16.mxu0 0
      %900 = vmatpush1.bf16.msra.mxu0 0
      %901 = vmatprep.subr.bf16.mxu0 0
      %902 = vmatpush1.bf16.msra.mxu0 0
      %903 = vmatprep.subr.bf16.mxu0 0
      %904 = vmatpush1.bf16.msra.mxu0 0
      %905 = vmatprep.subr.bf16.mxu0 0
      %906 = vmatpush1.bf16.msra.mxu0 0
      %907 = vmatprep.subr.bf16.mxu0 0
      %908 = vmatpush1.bf16.msra.mxu0 0
      %909 = vmatprep.subr.bf16.mxu0 0
      %910 = vmatpush1.bf16.msra.mxu0 0
      %911 = vmatprep.subr.bf16.mxu0 0
      %912 = vmatpush1.bf16.msra.mxu0 0
      %913 = vmatprep.mubr.bf16.mxu0 0
      %914 = vmatmul.mubr.bf16.gmra.mrb[0].mxu0 %v880
      %v915 = vpop.f32.mrb[0].mxu0
      %v916 = vadd.f32 0.0, %v915
      %v917 = vpop.f32.mrb[0].mxu0
      %v918 = vadd.f32 0.0, %v917
      %v919 = vpop.f32.mrb[0].mxu0
      %v920 = vpop.f32.mrb[0].mxu0
      %921 = vdwg.mxu0
      %922 = vmatprep.subr.bf16.mxu0 %v700
      %923 = vmatpush1.bf16.msra.mxu0 %v699
      %924 = vmatprep.subr.bf16.mxu0 %v704
      %925 = vmatpush1.bf16.msra.mxu0 %v703
      %926 = vmatprep.subr.bf16.mxu0 %v708
      %927 = vmatpush1.bf16.msra.mxu0 %v707
      %928 = vmatprep.subr.bf16.mxu0 %v712
      %929 = vmatpush1.bf16.msra.mxu0 %v711
      %930 = vmatprep.subr.bf16.mxu0 %v716
      %931 = vmatpush1.bf16.msra.mxu0 %v715
      %932 = vmatprep.subr.bf16.mxu0 %v720
      %933 = vmatpush1.bf16.msra.mxu0 %v719
      %934 = vmatprep.subr.bf16.mxu0 %v724
      %935 = vmatpush1.bf16.msra.mxu0 %v723
      %936 = vmatprep.subr.bf16.mxu0 %v728
      %937 = vmatpush1.bf16.msra.mxu0 %v727
      %938 = vmatprep.subr.bf16.mxu0 0
      %939 = vmatpush1.bf16.msra.mxu0 0
      %940 = vmatprep.subr.bf16.mxu0 0
      %941 = vmatpush1.bf16.msra.mxu0 0
      %942 = vmatprep.subr.bf16.mxu0 0
      %943 = vmatpush1.bf16.msra.mxu0 0
      %944 = vmatprep.subr.bf16.mxu0 0
      %945 = vmatpush1.bf16.msra.mxu0 0
      %946 = vmatprep.subr.bf16.mxu0 0
      %947 = vmatpush1.bf16.msra.mxu0 0
      %948 = vmatprep.subr.bf16.mxu0 0
      %949 = vmatpush1.bf16.msra.mxu0 0
      %950 = vmatprep.subr.bf16.mxu0 0
      %951 = vmatpush1.bf16.msra.mxu0 0
      %952 = vmatprep.subr.bf16.mxu0 0
      %953 = vmatpush1.bf16.msra.mxu0 0
      %954 = vmatprep.mubr.bf16.mxu0 0
      %955 = vmatmul.mubr.bf16.gmra.mrb[0].mxu0 %v880
      %v956 = vpop.f32.mrb[0].mxu0
      %v957 = vadd.f32 0.0, %v956
      %v958 = vpop.f32.mrb[0].mxu0
      %v959 = vadd.f32 0.0, %v958
      %v960 = vpop.f32.mrb[0].mxu0
      %v961 = vpop.f32.mrb[0].mxu0
      %962 = vdwg.mxu0
      %v963 = vadd.f32 %v496, %v916
      %v964 = vadd.f32 %v498, %v918
      %v965 = vadd.f32 %v549, %v957
      %v966 = vadd.f32 %v551, %v959
      %v967 = vxor.u32 %v963, 2147483648
      %v968 = vmul.f32 %v967, 1.442695
      %v969 = vpow.pop %v968
      %v970 = vadd.f32 %v969, 1.0
      %v971 = vrcp.pop %v970
      %v972 = vmul.f32 1.0, %v971
      %v973 = vxor.u32 %v964, 2147483648
      %v974 = vmul.f32 %v973, 1.442695
      %v975 = vpow.pop %v974
      %v976 = vadd.f32 %v975, 1.0
      %v977 = vrcp.pop %v976
      %v978 = vmul.f32 1.0, %v977
      %v979 = vtanh.pop %v965
      %v980 = vxor.u32 %v966, 2147483648
      %v981 = vmul.f32 %v980, 1.442695
      %v982 = vpow.pop %v981
      %v983 = vadd.f32 %v982, 1.0
      %v984 = vrcp.pop %v983
      %v985 = vmul.f32 1.0, %v984
      %v986 = vmul.f32 %v978, %v876
      %v987 = vmul.f32 %v972, %v979
      %v988 = vadd.f32 %v986, %v987
      %v989 = vtanh.pop %v988
      %v990 = vmul.f32 %v985, %v989
      %v991 = vstv %s879
      %vm992 = vcmp.ge.s32.totalorder %v991, %v563
      %vm993 = vcmp.lt.s32.totalorder %v991, %v564
      %vm994 = vmand %vm992, %vm993
      %v995 = vsel %vm994, %v990, %v875
      %v996 = vsel %vm994, %v988, %v876
      %v997 = vsel %vm994, %v990, 0.0
      %s998 = scalar_lea.vmem %s307, 8
      %999 = vst [vmem:[%s998] sm:$0xff] %v997
      %s1000 = sadd.s32 %s599, 2
      %v1001 = vpack.c.bf16 %v995, %v995
      %1002 = vmatprep.subr.bf16.mxu0 %v698
      %1003 = vmatpush1.bf16.msra.mxu0 %v697
      %1004 = vmatprep.subr.bf16.mxu0 %v702
      %1005 = vmatpush1.bf16.msra.mxu0 %v701
      %1006 = vmatprep.subr.bf16.mxu0 %v706
      %1007 = vmatpush1.bf16.msra.mxu0 %v705
      %1008 = vmatprep.subr.bf16.mxu0 %v710
      %1009 = vmatpush1.bf16.msra.mxu0 %v709
      %1010 = vmatprep.subr.bf16.mxu0 %v714
      %1011 = vmatpush1.bf16.msra.mxu0 %v713
      %1012 = vmatprep.subr.bf16.mxu0 %v718
      %1013 = vmatpush1.bf16.msra.mxu0 %v717
      %1014 = vmatprep.subr.bf16.mxu0 %v722
      %1015 = vmatpush1.bf16.msra.mxu0 %v721
      %1016 = vmatprep.subr.bf16.mxu0 %v726
      %1017 = vmatpush1.bf16.msra.mxu0 %v725
      %1018 = vmatprep.subr.bf16.mxu0 0
      %1019 = vmatpush1.bf16.msra.mxu0 0
      %1020 = vmatprep.subr.bf16.mxu0 0
      %1021 = vmatpush1.bf16.msra.mxu0 0
      %1022 = vmatprep.subr.bf16.mxu0 0
      %1023 = vmatpush1.bf16.msra.mxu0 0
      %1024 = vmatprep.subr.bf16.mxu0 0
      %1025 = vmatpush1.bf16.msra.mxu0 0
      %1026 = vmatprep.subr.bf16.mxu0 0
      %1027 = vmatpush1.bf16.msra.mxu0 0
      %1028 = vmatprep.subr.bf16.mxu0 0
      %1029 = vmatpush1.bf16.msra.mxu0 0
      %1030 = vmatprep.subr.bf16.mxu0 0
      %1031 = vmatpush1.bf16.msra.mxu0 0
      %1032 = vmatprep.subr.bf16.mxu0 0
      %1033 = vmatpush1.bf16.msra.mxu0 0
      %1034 = vmatprep.mubr.bf16.mxu0 0
      %1035 = vmatmul.mubr.bf16.gmra.mrb[0].mxu0 %v1001
      %v1036 = vpop.f32.mrb[0].mxu0
      %v1037 = vadd.f32 0.0, %v1036
      %v1038 = vpop.f32.mrb[0].mxu0
      %v1039 = vadd.f32 0.0, %v1038
      %v1040 = vpop.f32.mrb[0].mxu0
      %v1041 = vpop.f32.mrb[0].mxu0
      %1042 = vdwg.mxu0
      %1043 = vmatprep.subr.bf16.mxu0 %v700
      %1044 = vmatpush1.bf16.msra.mxu0 %v699
      %1045 = vmatprep.subr.bf16.mxu0 %v704
      %1046 = vmatpush1.bf16.msra.mxu0 %v703
      %1047 = vmatprep.subr.bf16.mxu0 %v708
      %1048 = vmatpush1.bf16.msra.mxu0 %v707
      %1049 = vmatprep.subr.bf16.mxu0 %v712
      %1050 = vmatpush1.bf16.msra.mxu0 %v711
      %1051 = vmatprep.subr.bf16.mxu0 %v716
      %1052 = vmatpush1.bf16.msra.mxu0 %v715
      %1053 = vmatprep.subr.bf16.mxu0 %v720
      %1054 = vmatpush1.bf16.msra.mxu0 %v719
      %1055 = vmatprep.subr.bf16.mxu0 %v724
      %1056 = vmatpush1.bf16.msra.mxu0 %v723
      %1057 = vmatprep.subr.bf16.mxu0 %v728
      %1058 = vmatpush1.bf16.msra.mxu0 %v727
      %1059 = vmatprep.subr.bf16.mxu0 0
      %1060 = vmatpush1.bf16.msra.mxu0 0
      %1061 = vmatprep.subr.bf16.mxu0 0
      %1062 = vmatpush1.bf16.msra.mxu0 0
      %1063 = vmatprep.subr.bf16.mxu0 0
      %1064 = vmatpush1.bf16.msra.mxu0 0
      %1065 = vmatprep.subr.bf16.mxu0 0
      %1066 = vmatpush1.bf16.msra.mxu0 0
      %1067 = vmatprep.subr.bf16.mxu0 0
      %1068 = vmatpush1.bf16.msra.mxu0 0
      %1069 = vmatprep.subr.bf16.mxu0 0
      %1070 = vmatpush1.bf16.msra.mxu0 0
      %1071 = vmatprep.subr.bf16.mxu0 0
      %1072 = vmatpush1.bf16.msra.mxu0 0
      %1073 = vmatprep.subr.bf16.mxu0 0
      %1074 = vmatpush1.bf16.msra.mxu0 0
      %1075 = vmatprep.mubr.bf16.mxu0 0
      %1076 = vmatmul.mubr.bf16.gmra.mrb[0].mxu0 %v1001
      %v1077 = vpop.f32.mrb[0].mxu0
      %v1078 = vadd.f32 0.0, %v1077
      %v1079 = vpop.f32.mrb[0].mxu0
      %v1080 = vadd.f32 0.0, %v1079
      %v1081 = vpop.f32.mrb[0].mxu0
      %v1082 = vpop.f32.mrb[0].mxu0
      %1083 = vdwg.mxu0
      %v1084 = vadd.f32 %v502, %v1037
      %v1085 = vadd.f32 %v504, %v1039
      %v1086 = vadd.f32 %v555, %v1078
      %v1087 = vadd.f32 %v557, %v1080
      %v1088 = vxor.u32 %v1084, 2147483648
      %v1089 = vmul.f32 %v1088, 1.442695
      %v1090 = vpow.pop %v1089
      %v1091 = vadd.f32 %v1090, 1.0
      %v1092 = vrcp.pop %v1091
      %v1093 = vmul.f32 1.0, %v1092
      %v1094 = vxor.u32 %v1085, 2147483648
      %v1095 = vmul.f32 %v1094, 1.442695
      %v1096 = vpow.pop %v1095
      %v1097 = vadd.f32 %v1096, 1.0
      %v1098 = vrcp.pop %v1097
      %v1099 = vmul.f32 1.0, %v1098
      %v1100 = vtanh.pop %v1086
      %v1101 = vxor.u32 %v1087, 2147483648
      %v1102 = vmul.f32 %v1101, 1.442695
      %v1103 = vpow.pop %v1102
      %v1104 = vadd.f32 %v1103, 1.0
      %v1105 = vrcp.pop %v1104
      %v1106 = vmul.f32 1.0, %v1105
      %v1107 = vmul.f32 %v1099, %v996
      %v1108 = vmul.f32 %v1093, %v1100
      %v1109 = vadd.f32 %v1107, %v1108
      %v1110 = vtanh.pop %v1109
      %v1111 = vmul.f32 %v1106, %v1110
      %v1112 = vstv %s1000
      %vm1113 = vcmp.ge.s32.totalorder %v1112, %v563
      %vm1114 = vcmp.lt.s32.totalorder %v1112, %v564
      %vm1115 = vmand %vm1113, %vm1114
      %v1116 = vsel %vm1115, %v1111, %v995
      %v1117 = vsel %vm1115, %v1109, %v996
      %v1118 = vsel %vm1115, %v1111, 0.0
      %s1119 = scalar_lea.vmem %s307, 16
      %1120 = vst [vmem:[%s1119] sm:$0xff] %v1118
      %s1121 = sadd.s32 %s599, 3
      %v1122 = vpack.c.bf16 %v1116, %v1116
      %1123 = vmatprep.subr.bf16.mxu0 %v698
      %1124 = vmatpush1.bf16.msra.mxu0 %v697
      %1125 = vmatprep.subr.bf16.mxu0 %v702
      %1126 = vmatpush1.bf16.msra.mxu0 %v701
      %1127 = vmatprep.subr.bf16.mxu0 %v706
      %1128 = vmatpush1.bf16.msra.mxu0 %v705
      %1129 = vmatprep.subr.bf16.mxu0 %v710
      %1130 = vmatpush1.bf16.msra.mxu0 %v709
      %1131 = vmatprep.subr.bf16.mxu0 %v714
      %1132 = vmatpush1.bf16.msra.mxu0 %v713
      %1133 = vmatprep.subr.bf16.mxu0 %v718
      %1134 = vmatpush1.bf16.msra.mxu0 %v717
      %1135 = vmatprep.subr.bf16.mxu0 %v722
      %1136 = vmatpush1.bf16.msra.mxu0 %v721
      %1137 = vmatprep.subr.bf16.mxu0 %v726
      %1138 = vmatpush1.bf16.msra.mxu0 %v725
      %1139 = vmatprep.subr.bf16.mxu0 0
      %1140 = vmatpush1.bf16.msra.mxu0 0
      %1141 = vmatprep.subr.bf16.mxu0 0
      %1142 = vmatpush1.bf16.msra.mxu0 0
      %1143 = vmatprep.subr.bf16.mxu0 0
      %1144 = vmatpush1.bf16.msra.mxu0 0
      %1145 = vmatprep.subr.bf16.mxu0 0
      %1146 = vmatpush1.bf16.msra.mxu0 0
      %1147 = vmatprep.subr.bf16.mxu0 0
      %1148 = vmatpush1.bf16.msra.mxu0 0
      %1149 = vmatprep.subr.bf16.mxu0 0
      %1150 = vmatpush1.bf16.msra.mxu0 0
      %1151 = vmatprep.subr.bf16.mxu0 0
      %1152 = vmatpush1.bf16.msra.mxu0 0
      %1153 = vmatprep.subr.bf16.mxu0 0
      %1154 = vmatpush1.bf16.msra.mxu0 0
      %1155 = vmatprep.mubr.bf16.mxu0 0
      %1156 = vmatmul.mubr.bf16.gmra.mrb[0].mxu0 %v1122
      %v1157 = vpop.f32.mrb[0].mxu0
      %v1158 = vadd.f32 0.0, %v1157
      %v1159 = vpop.f32.mrb[0].mxu0
      %v1160 = vadd.f32 0.0, %v1159
      %v1161 = vpop.f32.mrb[0].mxu0
      %v1162 = vpop.f32.mrb[0].mxu0
      %1163 = vdwg.mxu0
      %1164 = vmatprep.subr.bf16.mxu0 %v700
      %1165 = vmatpush1.bf16.msra.mxu0 %v699
      %1166 = vmatprep.subr.bf16.mxu0 %v704
      %1167 = vmatpush1.bf16.msra.mxu0 %v703
      %1168 = vmatprep.subr.bf16.mxu0 %v708
      %1169 = vmatpush1.bf16.msra.mxu0 %v707
      %1170 = vmatprep.subr.bf16.mxu0 %v712
      %1171 = vmatpush1.bf16.msra.mxu0 %v711
      %1172 = vmatprep.subr.bf16.mxu0 %v716
      %1173 = vmatpush1.bf16.msra.mxu0 %v715
      %1174 = vmatprep.subr.bf16.mxu0 %v720
      %1175 = vmatpush1.bf16.msra.mxu0 %v719
      %1176 = vmatprep.subr.bf16.mxu0 %v724
      %1177 = vmatpush1.bf16.msra.mxu0 %v723
      %1178 = vmatprep.subr.bf16.mxu0 %v728
      %1179 = vmatpush1.bf16.msra.mxu0 %v727
      %1180 = vmatprep.subr.bf16.mxu0 0
      %1181 = vmatpush1.bf16.msra.mxu0 0
      %1182 = vmatprep.subr.bf16.mxu0 0
      %1183 = vmatpush1.bf16.msra.mxu0 0
      %1184 = vmatprep.subr.bf16.mxu0 0
      %1185 = vmatpush1.bf16.msra.mxu0 0
      %1186 = vmatprep.subr.bf16.mxu0 0
      %1187 = vmatpush1.bf16.msra.mxu0 0
      %1188 = vmatprep.subr.bf16.mxu0 0
      %1189 = vmatpush1.bf16.msra.mxu0 0
      %1190 = vmatprep.subr.bf16.mxu0 0
      %1191 = vmatpush1.bf16.msra.mxu0 0
      %1192 = vmatprep.subr.bf16.mxu0 0
      %1193 = vmatpush1.bf16.msra.mxu0 0
      %1194 = vmatprep.subr.bf16.mxu0 0
      %1195 = vmatpush1.bf16.msra.mxu0 0
      %1196 = vmatprep.mubr.bf16.mxu0 0
      %1197 = vmatmul.mubr.bf16.gmra.mrb[0].mxu0 %v1122
      %v1198 = vpop.f32.mrb[0].mxu0
      %v1199 = vadd.f32 0.0, %v1198
      %v1200 = vpop.f32.mrb[0].mxu0
      %v1201 = vadd.f32 0.0, %v1200
      %v1202 = vpop.f32.mrb[0].mxu0
      %v1203 = vpop.f32.mrb[0].mxu0
      %1204 = vdwg.mxu0
      %v1205 = vadd.f32 %v506, %v1158
      %v1206 = vadd.f32 %v508, %v1160
      %v1207 = vadd.f32 %v559, %v1199
      %v1208 = vadd.f32 %v561, %v1201
      %v1209 = vxor.u32 %v1205, 2147483648
      %v1210 = vmul.f32 %v1209, 1.442695
      %v1211 = vpow.pop %v1210
      %v1212 = vadd.f32 %v1211, 1.0
      %v1213 = vrcp.pop %v1212
      %v1214 = vmul.f32 1.0, %v1213
      %v1215 = vxor.u32 %v1206, 2147483648
      %v1216 = vmul.f32 %v1215, 1.442695
      %v1217 = vpow.pop %v1216
      %v1218 = vadd.f32 %v1217, 1.0
      %v1219 = vrcp.pop %v1218
      %v1220 = vmul.f32 1.0, %v1219
      %v1221 = vtanh.pop %v1207
      %v1222 = vxor.u32 %v1208, 2147483648
      %v1223 = vmul.f32 %v1222, 1.442695
      %v1224 = vpow.pop %v1223
      %v1225 = vadd.f32 %v1224, 1.0
      %v1226 = vrcp.pop %v1225
      %v1227 = vmul.f32 1.0, %v1226
      %v1228 = vmul.f32 %v1220, %v1117
      %v1229 = vmul.f32 %v1214, %v1221
      %v1230 = vadd.f32 %v1228, %v1229
      %v1231 = vtanh.pop %v1230
      %v1232 = vmul.f32 %v1227, %v1231
      %v1233 = vstv %s1121
      %vm1234 = vcmp.ge.s32.totalorder %v1233, %v563
      %vm1235 = vcmp.lt.s32.totalorder %v1233, %v564
      %vm1236 = vmand %vm1234, %vm1235
      %v1237 = vsel %vm1236, %v1232, %v1116
      %v1238 = vsel %vm1236, %v1230, %v1117
      %v1239 = vsel %vm1236, %v1232, 0.0
      %s1240 = scalar_lea.vmem %s307, 24
      %1241 = vst [vmem:[%s1240] sm:$0xff] %v1239
      %1242 = vst [vmem:[#allocation2] sm:$0xff] %v1237
      %1243 = vst [vmem:[#allocation3] sm:$0xff] %v1238
      %s1244 = smul.u32 4, %s19
      %p1245 = scmp.lt.s32.totalorder %s1244, 7
      %s1246 = scalar_select %p1245, %s1244, 7
      %s1247 = smul.addr %s1246, 8
      %s1248 = scalar_lea.vmem %s8, %s1247
      // Predicated region
      $region57: #{delex_bilstm_forward.1} parent=51 // pred_check
        %p1249 = pneg %p210
      $region58: #{delex_bilstm_forward.1} parent=51 // pred_check_branch
        %1251 = sbr.rel (%p1249) target = $region60
      $region59: #{delex_bilstm_forward.1} parent=51 // pred_region
        %s1252 = smul.u32 4, %s19
      $region60: #{delex_bilstm_forward.1} parent=51 // pred_fallthru
        _
    $region52: #{delex_bilstm_forward.1} parent=5 // pred_fallthru
      _
    %p1253 = scmp.le.s32.totalorder 2, %s14
    // Predicated region
    $region61: #{delex_bilstm_forward.1} parent=5 // pred_check
      %p1254 = pneg %p1253
    $region62: #{delex_bilstm_forward.1} parent=5 // pred_check_branch
      %1256 = sbr.rel (%p1254) target = $region64
    $region63: #{delex_bilstm_forward.1} parent=5 // pred_region
      %s1257 = ssub.s32 %s14, 2
      // Predicated region
      $region65: #{delex_bilstm_forward.1} parent=63 // pred_check
        %p1258 = pneg %p216
      $region66: #{delex_bilstm_forward.1} parent=63 // pred_check_branch
        %1260 = sbr.rel (%p1258) target = $region68
      $region67: #{delex_bilstm_forward.1} parent=63 // pred_region
        %s1261 = smul.u32 4, %s20
        %p1262 = scmp.lt.s32.totalorder %s1261, 7
        %s1263 = scalar_select %p1262, %s1261, 7
        %s1264 = smul.addr %s1263, 8
        %s1265 = scalar_lea.vmem %s8, %s1264
      $region68: #{delex_bilstm_forward.1} parent=63 // pred_fallthru
        _
    $region64: #{delex_bilstm_forward.1} parent=5 // pred_fallthru
      _
  $region6: #{delex_bilstm_forward.1} parent=0 // loop_footer
    %s18 = sadd.s32 1, %s14
  $region7: #{delex_bilstm_forward.1} parent=0 // loop_footer_branch
    %13 = sbr.rel target = $region3
  $region8: #{delex_bilstm_forward.1} parent=0 // loop_exit
    _

</llo_original>
